<compile_context>
chip_gen: v6e
topology: v6e:2x2x1
jax: 0.10.0
libtpu: 0.0.40
codegen_flags: <defaults>
</compile_context>

<pallas_src>
import functools

import jax
import jax.numpy as jnp
from jax.experimental import pallas as pl
from jax.experimental.pallas import tpu as pltpu


def _round_up(a, b):
    return -(-a // b) * b


# ----------------------------------------------------------------------------
# Pallas kernels
# ----------------------------------------------------------------------------
def _bmm_t_kernel(w_ref, x_ref, o_ref):
    # w: (1, N, K) bf16 ; x: (1, K, TM) bf16 -> o: (1, N, TM)  (MXU, f32 acc)
    o_ref[0] = jnp.dot(w_ref[0], x_ref[0],
                       preferred_element_type=jnp.float32).astype(o_ref.dtype)


def pallas_bmm_t(w, xT, *, tm=512, out_dtype=jnp.float32):
    """Batched transposed matmul on the MXU:  out[g] = w[g or 0] @ xT[g or 0].

    w  : (Gw, N, K)  with Gw in {1, G}
    xT : (Gx, K, M)  with Gx in {1, G}
    returns (G, N, M) in out_dtype.

    K is never padded (K blocks are full-extent, exempt from the (8,128)
    rule); M is only padded when it exceeds a single tile.  Operands are bf16
    with f32 accumulation; the output block (N, TM) is lane-dense over M.
    """
    Gw, N, K = w.shape
    Gx, K2, M = xT.shape
    assert K == K2
    G = max(Gw, Gx)
    assert Gw in (1, G) and Gx in (1, G)
    if M <= tm:
        mt, Mp = M, M
    else:
        mt, Mp = tm, _round_up(M, tm)
    wb = w.astype(jnp.bfloat16)
    xb = xT.astype(jnp.bfloat16)
    if Mp != M:
        xb = jnp.pad(xb, ((0, 0), (0, 0), (0, Mp - M)))
    w_map = (lambda g, j: (0, 0, 0)) if Gw == 1 else (lambda g, j: (g, 0, 0))
    x_map = (lambda g, j: (0, 0, j)) if Gx == 1 else (lambda g, j: (g, 0, j))
    out = pl.pallas_call(
        _bmm_t_kernel,
        out_shape=jax.ShapeDtypeStruct((G, N, Mp), out_dtype),
        grid=(G, Mp // mt),
        in_specs=[pl.BlockSpec((1, N, K), w_map),
                  pl.BlockSpec((1, K, mt), x_map)],
        out_specs=pl.BlockSpec((1, N, mt), lambda g, j: (g, 0, j)),
        compiler_params=pltpu.CompilerParams(
            dimension_semantics=("parallel", "parallel")),
    )(wb, xb)
    return out[:, :, :M] if Mp != M else out


def _qattn_fused_kernel(w_ref, x_ref, o_ref, *, inv_g, num_heads, channels):
    # w: (3*nh*C, C) bf16 = [theta_hm ; phi_hm ; gamma*psi_eff]
    # x: (C, TM) bf16 (flat feas, transposed)
    # o: (C, TM)    = feas + gamma * quadrant_attention(feas)
    x = x_ref[...]
    z = jnp.dot(w_ref[...], x, preferred_element_type=jnp.float32)
    hc = num_heads * channels
    acc = x.astype(jnp.float32)                        # residual (feas)
    for h in range(num_heads):
        lo = h * channels
        th = z[lo:lo + channels, :]
        ph = z[hc + lo:hc + lo + channels, :]
        ps = z[2 * hc + lo:2 * hc + lo + channels, :]  # gamma already folded in
        a = th * ph * inv_g
        a = a - jnp.max(a, axis=0, keepdims=True)
        e = jnp.exp(a)
        denom = jnp.sum(e, axis=0, keepdims=True)
        # EUP reciprocal (separate VLIW slot) instead of a VALU divide
        acc = acc + (e * pl.reciprocal(denom, approx=True)) * ps
    o_ref[...] = acc.astype(o_ref.dtype)


def pallas_fused_qattention(w_all, flatT, *, num_heads, channels, quarters,
                            tm=256, out_dtype=jnp.bfloat16):
    """flatT: (C, M); w_all: (3*nh*C, C)  ->  (C, M) = feas + gamma*attn."""
    N3, C = w_all.shape
    C2, M = flatT.shape
    assert C == C2 == channels and N3 == 3 * num_heads * channels
    if M <= tm:
        mt, Mp = M, M
    else:
        mt, Mp = tm, _round_up(M, tm)
    xb = flatT.astype(jnp.bfloat16)
    if Mp != M:
        xb = jnp.pad(xb, ((0, 0), (0, Mp - M)))
    kern = functools.partial(_qattn_fused_kernel,
                             inv_g=1.0 / float(channels // quarters),
                             num_heads=num_heads, channels=channels)
    out = pl.pallas_call(
        kern,
        out_shape=jax.ShapeDtypeStruct((channels, Mp), out_dtype),
        grid=(Mp // mt,),
        in_specs=[pl.BlockSpec((N3, C), lambda j: (0, 0)),
                  pl.BlockSpec((C, mt), lambda j: (0, j))],
        out_specs=pl.BlockSpec((channels, mt), lambda j: (0, j)),
        compiler_params=pltpu.CompilerParams(dimension_semantics=("parallel",)),
    )(w_all.astype(jnp.bfloat16), xb)
    return out[:, :M] if Mp != M else out


# ----------------------------------------------------------------------------
# attention weight folding (trace-time, tiny)
# ----------------------------------------------------------------------------
def build_attention_weights(W_theta, W_phi, W_psi, gamma, num_heads, channels):
    """Fold the theta/phi linears, psi = Linear(phi.transpose(2,3)) with its
    .view(B,HW,C,nh) buffer reinterpretation, and the gamma residual scale
    into a single (3*nh*C, C) weight so the attention is one matmul."""
    C, nh = channels, num_heads

    def head_major(Wlin):       # row h*C + c of result == row c*nh + h of Wlin
        return Wlin.reshape(C, nh, C).transpose(1, 0, 2).reshape(nh * C, C)

    Wt = head_major(W_theta)
    Wp = head_major(W_phi)
    # psi[b,s,c2,h2] = psi_lin[b,s,h,c'] with h*C + c' == c2*nh + h2 (torch .view
    # trick) and psi_lin[.,.,h,c'] = sum_c W_psi[c',c]*phi[.,.,c,h]; compose with
    # the phi linear so psi is a direct linear function of the flat input.
    psi_pre = jnp.einsum('pc,hck->hpk', W_psi, Wp.reshape(nh, C, C))
    psi_pre = psi_pre.reshape(nh * C, C)                        # row = h*C + c'
    W_psi_eff = (psi_pre.reshape(C, nh, C).transpose(1, 0, 2)
                         .reshape(nh * C, C))                   # row = h2*C + c2
    W_psi_eff = W_psi_eff * jnp.asarray(gamma).reshape(())      # fold gamma
    return jnp.concatenate([Wt, Wp, W_psi_eff], axis=0)         # (3*nh*C, C)


# ----------------------------------------------------------------------------
# static per-disparity planning (same Python branching as the PyTorch module)
# ----------------------------------------------------------------------------
def _sign(x):
    return 1 if x > 0 else (-1 if x < 0 else 0)


def _casual_plan(angRes, interval, index, mindisp):
    d = mindisp + index * interval
    if d == 0:
        dilat, widx = 1, 0
        P = int(angRes // 2 * dilat)
    elif index % 4 == 0:
        dilat = int(_sign(d) * (d * angRes - 1)); widx = 0
        P = int(angRes // 2 * dilat)
    elif index % 4 == 2:
        dilat = int(_sign(d) * 2 * (d * angRes - 1)); widx = 1
        P = int(angRes // 4 * dilat)
    else:
        dilat = int(_sign(d) * 4 * (d * angRes - 1)); widx = 2
        P = int(angRes // 8 * dilat)
    return widx, dilat, P


def _full_plan(angRes, interval, index, mindisp):
    d = mindisp + index * interval
    if d == 0:
        dilat, widx, pad = 1, 0, 0
    elif index % 4 == 0:
        dilat = int(_sign(d) * (d * angRes - 1)); widx = 0
        pad = int(angRes // 2 * dilat - angRes // 2)
    elif index % 4 == 2:
        dilat = int(_sign(d) * 2 * (d * angRes - 1)); widx = 1
        pad = int(angRes // 4 * dilat - angRes // 2)
    else:
        dilat = int(_sign(d) * 4 * (d * angRes - 1)); widx = 2
        pad = int(angRes // 8 * dilat - angRes // 2)
    return widx, dilat, pad


def _case_offsets(P, case):
    # torch F.pad order is (left, right, top, bottom); the four casual cases are
    # the four corner windows of the all-sides reflect-padded input.
    if case == 1:
        return 0, 0       # pad top/left
    elif case == 2:
        return 0, P       # pad top/right
    elif case == 3:
        return P, 0       # pad bottom/left
    else:
        return P, P       # pad bottom/right


# ----------------------------------------------------------------------------
# Module forward
# ----------------------------------------------------------------------------
def sub_cost_volum_forward(x, params, angRes, dispmin, dispmax, dispnum,
                           tm=512, tm_attn=256):
    interval = (dispmax - dispmin) / (dispnum - 1)
    B, Cin, Hin, Win = x.shape
    a2 = angRes // 2
    x_crop = x[:, :, a2:, a2:]
    Hc, Wc = x_crop.shape[2], x_crop.shape[3]

    quad_names = ('lu', 'ru', 'lb', 'rb')
    Cfc = params['lu'][0].shape[0]
    Cout = params['full'][0].shape[0]
    num_heads, quarters = 4, 4
    Catt = 4 * Cfc

    # -- plan every disparity (Python ints, like the torch branching) ---------
    casual_groups, full_groups = {}, {}
    casual_info, full_info = [], []
    for i in range(dispnum):
        cw, cdil, cP = _casual_plan(angRes, interval, i, dispmin)
        fw, fdil, fpad = _full_plan(angRes, interval, i, dispmin)
        # reflect padding is only valid for pad < dim (same constraint as torch)
        assert 0 <= cP < min(Hc, Wc), \
            f"reflect pad {cP} too large for cropped input {x_crop.shape}"
        assert fpad >= 0
        casual_info.append((cw, cdil, cP))
        full_info.append((fw, fdil, fpad))
        casual_groups.setdefault(cw, []).append(i)
        full_groups.setdefault(fw, []).append(i)

    casual_kernels = {w: params['lu'][w].shape[2] for w in range(3)}
    full_kernels = {w: params['full'][w].shape[2] for w in range(3)}

    # channel-first once so im2col stacking needs no transpose of patch data
    x_crop_cf = x_crop.transpose(1, 0, 2, 3)          # (Cin, B, Hc, Wc)
    x_cf = x.transpose(1, 0, 2, 3)                    # (Cin, B, Hin, Win)

    # -- casual sub-cost convs: one batched matmul per kernel-size group ------
    Ho_c = (Hc - 1) // angRes + 1
    Wo_c = (Wc - 1) // angRes + 1
    HWc = Ho_c * Wo_c
    group_ids = sorted(casual_groups.keys())
    proc_disps = []
    casual_feat_groups = []
    for widx in group_ids:
        k = casual_kernels[widx]
        disp_ids = casual_groups[widx]
        n_g = len(disp_ids)
        proc_disps.extend(disp_ids)
        # one all-sides reflect pad per disparity, shared by the 4 quadrants
        pads = {}
        for i in disp_ids:
            _, dil, P = casual_info[i]
            assert (k - 1) * dil == P      # conv extent matches casual padding
            pads[i] = jnp.pad(x_crop_cf, ((0, 0), (0, 0), (P, P), (P, P)),
                              mode='reflect')
        quad_patches = []
        for q in range(4):
            slices = []
            for ky in range(k):
                for kx in range(k):
                    for i in disp_ids:
                        _, dil, P = casual_info[i]
                        ro, co = _case_offsets(P, q + 1)
                        y0, x0 = ro + ky * dil, co + kx * dil
                        slices.append(
                            pads[i][:, :,
                                    y0:y0 + (Ho_c - 1) * angRes + 1:angRes,
                                    x0:x0 + (Wo_c - 1) * angRes + 1:angRes])
            pat = jnp.stack(slices, axis=1)           # (Cin, k*k*n_g, B, Ho, Wo)
            quad_patches.append(pat.reshape(Cin * k * k, n_g * B * HWc))
        xT_g = jnp.stack(quad_patches, axis=0)                     # (4, K, Mg)
        w_g = jnp.stack(
            [params[quad_names[q]][widx].reshape(Cfc, Cin * k * k)
             for q in range(4)], axis=0)                           # (4, Cfc, K)
        out_g = pallas_bmm_t(w_g, xT_g, tm=tm, out_dtype=jnp.bfloat16)
        feat = (out_g.reshape(4, Cfc, n_g, B, Ho_c, Wo_c)
                      .transpose(2, 3, 0, 1, 4, 5)
                      .reshape(n_g * B, Catt, Ho_c, Wo_c))
        casual_feat_groups.append(feat)
    # (D*B, 4*Cfc, H, W) in group-processing order of the disparity axis
    x_att = jnp.concatenate(casual_feat_groups, axis=0)

    # -- full sub-cost convs: one batched matmul per kernel-size group --------
    fgroup_ids = sorted(full_groups.keys())
    Ho_f = Wo_f = None
    fproc_disps = []
    full_group_outs = []
    for widx in fgroup_ids:
        k = full_kernels[widx]
        disp_ids = full_groups[widx]
        n_g = len(disp_ids)
        fproc_disps.extend(disp_ids)
        pads = {}
        for i in disp_ids:
            _, dil, pad = full_info[i]
            Ho_i = (Hin + 2 * pad - dil * (k - 1) - 1) // angRes + 1
            Wo_i = (Win + 2 * pad - dil * (k - 1) - 1) // angRes + 1
            assert Ho_f in (None, Ho_i) and Wo_f in (None, Wo_i)
            Ho_f, Wo_f = Ho_i, Wo_i
            pads[i] = jnp.pad(x_cf, ((0, 0), (0, 0), (pad, pad), (pad, pad)))
        slices = []
        for ky in range(k):
            for kx in range(k):
                for i in disp_ids:
                    _, dil, _ = full_info[i]
                    y0, x0 = ky * dil, kx * dil
                    slices.append(
                        pads[i][:, :,
                                y0:y0 + (Ho_f - 1) * angRes + 1:angRes,
                                x0:x0 + (Wo_f - 1) * angRes + 1:angRes])
        pat = jnp.stack(slices, axis=1)               # (Cin, k*k*n_g, B, Ho, Wo)
        xT_g = pat.reshape(Cin * k * k, n_g * B * Ho_f * Wo_f)
        w_g = params['full'][widx].reshape(Cout, Cin * k * k)[None]
        out_g = pallas_bmm_t(w_g, xT_g[None], tm=tm, out_dtype=jnp.float32)
        full_group_outs.append(out_g[0].reshape(Cout, n_g, B, Ho_f, Wo_f))

    idx_f = jnp.asarray([fproc_disps.index(d) for d in range(dispnum)])
    cost_volumn_full = (jnp.concatenate(full_group_outs, axis=1)  # (Cout,D,B,H,W)
                        [:, idx_f]
                        .transpose(2, 0, 1, 3, 4))                # (B,Cout,D,H,W)

    # -- quadrant attention + residual + 1x1 fuse, all disparities at once ----
    DB = dispnum * B
    M_att = DB * Ho_c * Wo_c
    # torch: feas.view(-1, C) of the contiguous NCHW buffer, transposed for MXU
    flatT = x_att.reshape(M_att, Catt).T                          # (Catt, M) bf16
    W_all = build_attention_weights(params['W_theta'], params['W_phi'],
                                    params['W_psi'], params['gamma'],
                                    num_heads, Catt)
    out_t = pallas_fused_qattention(W_all, flatT, num_heads=num_heads,
                                    channels=Catt, quarters=quarters,
                                    tm=tm_attn, out_dtype=jnp.bfloat16)
    # torch: .view(B, HW, C) -> .view(B, C, H, W) raw buffer reinterpretation
    pix = out_t.T.reshape(DB, Catt, HWc)                          # (DB, Catt, HW)
    W_fuse = params['W_fuse'].reshape(Cout, Catt)[None]
    fused = pallas_bmm_t(W_fuse, pix, tm=tm, out_dtype=jnp.float32)  # (DB,Cout,HW)

    idx_c = jnp.asarray([proc_disps.index(d) for d in range(dispnum)])
    cost_volumn_casual = (fused.reshape(dispnum, B, Cout, Ho_c, Wo_c)
                          [idx_c]
                          .transpose(1, 2, 0, 3, 4))              # (B,Cout,D,H,W)
    return cost_volumn_casual, cost_volumn_full


# ----------------------------------------------------------------------------
if __name__ == "__main__":
    key = jax.random.PRNGKey(0)
    B, C_in, C_fc, C_out = 2, 2, 4, 8
    angRes = 9
    H = W = 4                                   # macro-pixel grid -> x is (B,C,36,36)
    dispmin, dispmax, dispnum = -0.75, 0.75, 7  # exact binary fractions -> d==0 hit exactly

    ks = jax.random.split(key, 20)
    wn = lambda k, shape: 0.1 * jax.random.normal(k, shape, jnp.float32)

    def casual_weights(k0, k1, k2):
        return (wn(k0, (C_fc, C_in, angRes // 2 + 1, angRes // 2 + 1)),
                wn(k1, (C_fc, C_in, angRes // 4 + 1, angRes // 4 + 1)),
                wn(k2, (C_fc, C_in, angRes // 8 + 1, angRes // 8 + 1)))

    params = {
        'lu': casual_weights(ks[0], ks[1], ks[2]),
        'ru': casual_weights(ks[3], ks[4], ks[5]),
        'lb': casual_weights(ks[6], ks[7], ks[8]),
        'rb': casual_weights(ks[9], ks[10], ks[11]),
        'full': (wn(ks[12], (C_out, C_in, angRes, angRes)),
                 wn(ks[13], (C_out, C_in, angRes // 2 + 1, angRes // 2 + 1)),
                 wn(ks[14], (C_out, C_in, angRes // 4 + 1, angRes // 4 + 1))),
        'W_theta': wn(ks[15], (C_fc * 4 * 4, C_fc * 4)),
        'W_phi':   wn(ks[16], (C_fc * 4 * 4, C_fc * 4)),
        'W_psi':   wn(ks[17], (C_fc * 4, C_fc * 4)),
        # torch __init__ uses zeros(1); nonzero so the attention path contributes.
        'gamma':   jnp.full((1,), 0.5, jnp.float32),
        'W_fuse':  wn(ks[18], (C_out, C_fc * 4, 1, 1)),
    }
    x = jax.random.normal(ks[19], (B, C_in, angRes * H, angRes * W), jnp.float32)

    fwd = jax.jit(functools.partial(sub_cost_volum_forward, angRes=angRes,
                                    dispmin=dispmin, dispmax=dispmax,
                                    dispnum=dispnum))
    cost_casual, cost_full = fwd(x, params)
    jax.block_until_ready((cost_casual, cost_full))

    assert cost_casual.shape == (B, C_out, dispnum, H, W), cost_casual.shape
    assert cost_full.shape == (B, C_out, dispnum, H, W), cost_full.shape
    assert bool(jnp.all(jnp.isfinite(cost_casual))) and bool(jnp.all(jnp.isfinite(cost_full)))
    print("KERNEL_OK")
</pallas_src>

<mosaic_0001>
module attributes {stable_mosaic.version = 11 : i64} {
  func.func @_bmm_t_kernel(%arg0: i32, %arg1: i32, %arg2: memref<1x4x8xbf16, #tpu.memory_space<vmem>>, %arg3: memref<1x8x64xbf16, #tpu.memory_space<vmem>>, %arg4: memref<1x4x64xbf16, #tpu.memory_space<vmem>>) attributes {dimension_semantics = [#tpu.dimension_semantics<parallel>, #tpu.dimension_semantics<parallel>], iteration_bounds = array<i64: 4, 1>, scalar_prefetch = 0 : i64, scratch_operands = 0 : i64, tpu.core_type = #tpu.core_type<tc>, window_params = [{transform_indices = @transform_0, window_bounds = array<i64: 1, 4, 8>}, {transform_indices = @transform_1, window_bounds = array<i64: 1, 8, 64>}, {transform_indices = @transform_2, window_bounds = array<i64: 1, 4, 64>}]} {
    %c0 = arith.constant 0 : index
    %c0_0 = arith.constant 0 : index
    %c0_1 = arith.constant 0 : index
    %0 = vector.load %arg2[%c0, %c0_0, %c0_1] : memref<1x4x8xbf16, #tpu.memory_space<vmem>>, vector<1x4x8xbf16>
    %1 = vector.shape_cast %0 : vector<1x4x8xbf16> to vector<4x8xbf16>
    %c0_2 = arith.constant 0 : index
    %c0_3 = arith.constant 0 : index
    %c0_4 = arith.constant 0 : index
    %2 = vector.load %arg3[%c0_2, %c0_3, %c0_4] : memref<1x8x64xbf16, #tpu.memory_space<vmem>>, vector<1x8x64xbf16>
    %3 = vector.shape_cast %2 : vector<1x8x64xbf16> to vector<8x64xbf16>
    %cst = arith.constant dense<0.000000e+00> : vector<4x64xf32>
    %4 = tpu.matmul %1, %3, %cst {dimension_numbers = #tpu.dot_dimension_numbers<[1], [0], [0], [1], [0, 0, 1, 1], [], []>} : vector<4x8xbf16>, vector<8x64xbf16>, vector<4x64xf32> -> vector<4x64xf32>
    %5 = arith.truncf %4 : vector<4x64xf32> to vector<4x64xbf16>
    %c0_5 = arith.constant 0 : index
    %c0_6 = arith.constant 0 : index
    %c0_7 = arith.constant 0 : index
    %6 = vector.load %arg4[%c0_5, %c0_6, %c0_7] : memref<1x4x64xbf16, #tpu.memory_space<vmem>>, vector<1x4x64xbf16>
    %7 = vector.shape_cast %6 : vector<1x4x64xbf16> to vector<4x64xbf16>
    %8 = vector.shape_cast %5 : vector<4x64xbf16> to vector<1x4x64xbf16>
    tpu.vector_store %arg4[%c0_5, %c0_6, %c0_7], %8 {strides = array<i32>} : memref<1x4x64xbf16, #tpu.memory_space<vmem>>, vector<1x4x64xbf16>,
    return
  }
  func.func @transform_0(%arg0: i32, %arg1: i32) -> (i32, i32, i32) {
    %c0_i32 = arith.constant 0 : i32
    %c0_i32_0 = arith.constant 0 : i32
    %c0_i32_1 = arith.constant 0 : i32
    return %arg0, %c0_i32, %c0_i32_0 : i32, i32, i32
  }
  func.func @transform_1(%arg0: i32, %arg1: i32) -> (i32, i32, i32) {
    %c0_i32 = arith.constant 0 : i32
    %c0_i32_0 = arith.constant 0 : i32
    return %arg0, %c0_i32, %arg1 : i32, i32, i32
  }
  func.func @transform_2(%arg0: i32, %arg1: i32) -> (i32, i32, i32) {
    %c0_i32 = arith.constant 0 : i32
    %c0_i32_0 = arith.constant 0 : i32
    return %arg0, %c0_i32, %arg1 : i32, i32, i32
  }
}

module attributes {stable_mosaic.version = 11 : i64} {
  func.func @_bmm_t_kernel(%arg0: i32, %arg1: i32, %arg2: memref<1x4x18xbf16, #tpu.memory_space<vmem>>, %arg3: memref<1x18x64xbf16, #tpu.memory_space<vmem>>, %arg4: memref<1x4x64xbf16, #tpu.memory_space<vmem>>) attributes {dimension_semantics = [#tpu.dimension_semantics<parallel>, #tpu.dimension_semantics<parallel>], iteration_bounds = array<i64: 4, 1>, scalar_prefetch = 0 : i64, scratch_operands = 0 : i64, tpu.core_type = #tpu.core_type<tc>, window_params = [{transform_indices = @transform_0, window_bounds = array<i64: 1, 4, 18>}, {transform_indices = @transform_1, window_bounds = array<i64: 1, 18, 64>}, {transform_indices = @transform_2, window_bounds = array<i64: 1, 4, 64>}]} {
    %c0 = arith.constant 0 : index
    %c0_0 = arith.constant 0 : index
    %c0_1 = arith.constant 0 : index
    %0 = vector.load %arg2[%c0, %c0_0, %c0_1] : memref<1x4x18xbf16, #tpu.memory_space<vmem>>, vector<1x4x18xbf16>
    %1 = vector.shape_cast %0 : vector<1x4x18xbf16> to vector<4x18xbf16>
    %c0_2 = arith.constant 0 : index
    %c0_3 = arith.constant 0 : index
    %c0_4 = arith.constant 0 : index
    %2 = vector.load %arg3[%c0_2, %c0_3, %c0_4] : memref<1x18x64xbf16, #tpu.memory_space<vmem>>, vector<1x18x64xbf16>
    %3 = vector.shape_cast %2 : vector<1x18x64xbf16> to vector<18x64xbf16>
    %cst = arith.constant dense<0.000000e+00> : vector<4x64xf32>
    %4 = tpu.matmul %1, %3, %cst {dimension_numbers = #tpu.dot_dimension_numbers<[1], [0], [0], [1], [0, 0, 1, 1], [], []>} : vector<4x18xbf16>, vector<18x64xbf16>, vector<4x64xf32> -> vector<4x64xf32>
    %5 = arith.truncf %4 : vector<4x64xf32> to vector<4x64xbf16>
    %c0_5 = arith.constant 0 : index
    %c0_6 = arith.constant 0 : index
    %c0_7 = arith.constant 0 : index
    %6 = vector.load %arg4[%c0_5, %c0_6, %c0_7] : memref<1x4x64xbf16, #tpu.memory_space<vmem>>, vector<1x4x64xbf16>
    %7 = vector.shape_cast %6 : vector<1x4x64xbf16> to vector<4x64xbf16>
    %8 = vector.shape_cast %5 : vector<4x64xbf16> to vector<1x4x64xbf16>
    tpu.vector_store %arg4[%c0_5, %c0_6, %c0_7], %8 {strides = array<i32>} : memref<1x4x64xbf16, #tpu.memory_space<vmem>>, vector<1x4x64xbf16>,
    return
  }
  func.func @transform_0(%arg0: i32, %arg1: i32) -> (i32, i32, i32) {
    %c0_i32 = arith.constant 0 : i32
    %c0_i32_0 = arith.constant 0 : i32
    %c0_i32_1 = arith.constant 0 : i32
    return %arg0, %c0_i32, %c0_i32_0 : i32, i32, i32
  }
  func.func @transform_1(%arg0: i32, %arg1: i32) -> (i32, i32, i32) {
    %c0_i32 = arith.constant 0 : i32
    %c0_i32_0 = arith.constant 0 : i32
    return %arg0, %c0_i32, %arg1 : i32, i32, i32
  }
  func.func @transform_2(%arg0: i32, %arg1: i32) -> (i32, i32, i32) {
    %c0_i32 = arith.constant 0 : i32
    %c0_i32_0 = arith.constant 0 : i32
    return %arg0, %c0_i32, %arg1 : i32, i32, i32
  }
}

module attributes {stable_mosaic.version = 11 : i64} {
  func.func @_bmm_t_kernel(%arg0: i32, %arg1: i32, %arg2: memref<1x4x50xbf16, #tpu.memory_space<vmem>>, %arg3: memref<1x50x96xbf16, #tpu.memory_space<vmem>>, %arg4: memref<1x4x96xbf16, #tpu.memory_space<vmem>>) attributes {dimension_semantics = [#tpu.dimension_semantics<parallel>, #tpu.dimension_semantics<parallel>], iteration_bounds = array<i64: 4, 1>, scalar_prefetch = 0 : i64, scratch_operands = 0 : i64, tpu.core_type = #tpu.core_type<tc>, window_params = [{transform_indices = @transform_0, window_bounds = array<i64: 1, 4, 50>}, {transform_indices = @transform_1, window_bounds = array<i64: 1, 50, 96>}, {transform_indices = @transform_2, window_bounds = array<i64: 1, 4, 96>}]} {
    %c0 = arith.constant 0 : index
    %c0_0 = arith.constant 0 : index
    %c0_1 = arith.constant 0 : index
    %0 = vector.load %arg2[%c0, %c0_0, %c0_1] : memref<1x4x50xbf16, #tpu.memory_space<vmem>>, vector<1x4x50xbf16>
    %1 = vector.shape_cast %0 : vector<1x4x50xbf16> to vector<4x50xbf16>
    %c0_2 = arith.constant 0 : index
    %c0_3 = arith.constant 0 : index
    %c0_4 = arith.constant 0 : index
    %2 = vector.load %arg3[%c0_2, %c0_3, %c0_4] : memref<1x50x96xbf16, #tpu.memory_space<vmem>>, vector<1x50x96xbf16>
    %3 = vector.shape_cast %2 : vector<1x50x96xbf16> to vector<50x96xbf16>
    %cst = arith.constant dense<0.000000e+00> : vector<4x96xf32>
    %4 = tpu.matmul %1, %3, %cst {dimension_numbers = #tpu.dot_dimension_numbers<[1], [0], [0], [1], [0, 0, 1, 1], [], []>} : vector<4x50xbf16>, vector<50x96xbf16>, vector<4x96xf32> -> vector<4x96xf32>
    %5 = arith.truncf %4 : vector<4x96xf32> to vector<4x96xbf16>
    %c0_5 = arith.constant 0 : index
    %c0_6 = arith.constant 0 : index
    %c0_7 = arith.constant 0 : index
    %6 = vector.load %arg4[%c0_5, %c0_6, %c0_7] : memref<1x4x96xbf16, #tpu.memory_space<vmem>>, vector<1x4x96xbf16>
    %7 = vector.shape_cast %6 : vector<1x4x96xbf16> to vector<4x96xbf16>
    %8 = vector.shape_cast %5 : vector<4x96xbf16> to vector<1x4x96xbf16>
    tpu.vector_store %arg4[%c0_5, %c0_6, %c0_7], %8 {strides = array<i32>} : memref<1x4x96xbf16, #tpu.memory_space<vmem>>, vector<1x4x96xbf16>,
    return
  }
  func.func @transform_0(%arg0: i32, %arg1: i32) -> (i32, i32, i32) {
    %c0_i32 = arith.constant 0 : i32
    %c0_i32_0 = arith.constant 0 : i32
    %c0_i32_1 = arith.constant 0 : i32
    return %arg0, %c0_i32, %c0_i32_0 : i32, i32, i32
  }
  func.func @transform_1(%arg0: i32, %arg1: i32) -> (i32, i32, i32) {
    %c0_i32 = arith.constant 0 : i32
    %c0_i32_0 = arith.constant 0 : i32
    return %arg0, %c0_i32, %arg1 : i32, i32, i32
  }
  func.func @transform_2(%arg0: i32, %arg1: i32) -> (i32, i32, i32) {
    %c0_i32 = arith.constant 0 : i32
    %c0_i32_0 = arith.constant 0 : i32
    return %arg0, %c0_i32, %arg1 : i32, i32, i32
  }
}

module attributes {stable_mosaic.version = 11 : i64} {
  func.func @_qattn_fused_kernel(%arg0: i32, %arg1: memref<192x16xbf16, #tpu.memory_space<vmem>>, %arg2: memref<16x224xbf16, #tpu.memory_space<vmem>>, %arg3: memref<16x224xbf16, #tpu.memory_space<vmem>>) attributes {dimension_semantics = [#tpu.dimension_semantics<parallel>], iteration_bounds = array<i64: 1>, scalar_prefetch = 0 : i64, scratch_operands = 0 : i64, tpu.core_type = #tpu.core_type<tc>, window_params = [{pipeline_mode = #tpu.pipeline_mode<synchronous>, transform_indices = @transform_0, window_bounds = array<i64: 192, 16>}, {transform_indices = @transform_1, window_bounds = array<i64: 16, 224>}, {transform_indices = @transform_2, window_bounds = array<i64: 16, 224>}]} {
    %c0 = arith.constant 0 : index
    %c0_0 = arith.constant 0 : index
    %0 = vector.load %arg2[%c0, %c0_0] : memref<16x224xbf16, #tpu.memory_space<vmem>>, vector<16x224xbf16>
    %c0_1 = arith.constant 0 : index
    %c0_2 = arith.constant 0 : index
    %1 = vector.load %arg1[%c0_1, %c0_2] : memref<192x16xbf16, #tpu.memory_space<vmem>>, vector<192x16xbf16>
    %cst = arith.constant dense<0.000000e+00> : vector<192x224xf32>
    %2 = tpu.matmul %1, %0, %cst {dimension_numbers = #tpu.dot_dimension_numbers<[1], [0], [0], [1], [0, 0, 1, 1], [], []>} : vector<192x16xbf16>, vector<16x224xbf16>, vector<192x224xf32> -> vector<192x224xf32>
    %3 = arith.extf %0 : vector<16x224xbf16> to vector<16x224xf32>
    %4 = vector.extract_strided_slice %2 {offsets = [0, 0], sizes = [16, 224], strides = [1, 1]} : vector<192x224xf32> to vector<16x224xf32>
    %5 = vector.extract_strided_slice %2 {offsets = [64, 0], sizes = [16, 224], strides = [1, 1]} : vector<192x224xf32> to vector<16x224xf32>
    %6 = vector.extract_strided_slice %2 {offsets = [128, 0], sizes = [16, 224], strides = [1, 1]} : vector<192x224xf32> to vector<16x224xf32>
    %7 = arith.mulf %4, %5 : vector<16x224xf32>
    %cst_3 = arith.constant 2.500000e-01 : f32
    %8 = vector.broadcast %cst_3 : f32 to vector<16x224xf32>
    %9 = arith.mulf %7, %8 : vector<16x224xf32>
    %cst_4 = arith.constant dense<0xFF800000> : vector<224xf32>
    %10 = vector.multi_reduction <maximumf>, %9, %cst_4 [0] : vector<16x224xf32> to vector<224xf32>
    %11 = vector.shape_cast %10 : vector<224xf32> to vector<1x224xf32>
    %12 = vector.broadcast %11 : vector<1x224xf32> to vector<16x224xf32>
    %13 = arith.subf %9, %12 : vector<16x224xf32>
    %14 = math.exp %13 : vector<16x224xf32>
    %cst_5 = arith.constant dense<0.000000e+00> : vector<224xf32>
    %15 = vector.multi_reduction <add>, %14, %cst_5 [0] : vector<16x224xf32> to vector<224xf32>
    %16 = vector.shape_cast %15 : vector<224xf32> to vector<1x224xf32>
    %17 = tpu.reciprocal %16 {approx = true} : vector<1x224xf32> -> vector<1x224xf32>
    %18 = vector.broadcast %17 : vector<1x224xf32> to vector<16x224xf32>
    %19 = arith.mulf %14, %18 : vector<16x224xf32>
    %20 = arith.mulf %19, %6 : vector<16x224xf32>
    %21 = arith.addf %3, %20 : vector<16x224xf32>
    %22 = vector.extract_strided_slice %2 {offsets = [16, 0], sizes = [16, 224], strides = [1, 1]} : vector<192x224xf32> to vector<16x224xf32>
    %23 = vector.extract_strided_slice %2 {offsets = [80, 0], sizes = [16, 224], strides = [1, 1]} : vector<192x224xf32> to vector<16x224xf32>
    %24 = vector.extract_strided_slice %2 {offsets = [144, 0], sizes = [16, 224], strides = [1, 1]} : vector<192x224xf32> to vector<16x224xf32>
    %25 = arith.mulf %22, %23 : vector<16x224xf32>
    %cst_6 = arith.constant 2.500000e-01 : f32
    %26 = vector.broadcast %cst_6 : f32 to vector<16x224xf32>
    %27 = arith.mulf %25, %26 : vector<16x224xf32>
    %cst_7 = arith.constant dense<0xFF800000> : vector<224xf32>
    %28 = vector.multi_reduction <maximumf>, %27, %cst_7 [0] : vector<16x224xf32> to vector<224xf32>
    %29 = vector.shape_cast %28 : vector<224xf32> to vector<1x224xf32>
    %30 = vector.broadcast %29 : vector<1x224xf32> to vector<16x224xf32>
    %31 = arith.subf %27, %30 : vector<16x224xf32>
    %32 = math.exp %31 : vector<16x224xf32>
    %cst_8 = arith.constant dense<0.000000e+00> : vector<224xf32>
    %33 = vector.multi_reduction <add>, %32, %cst_8 [0] : vector<16x224xf32> to vector<224xf32>
    %34 = vector.shape_cast %33 : vector<224xf32> to vector<1x224xf32>
    %35 = tpu.reciprocal %34 {approx = true} : vector<1x224xf32> -> vector<1x224xf32>
    %36 = vector.broadcast %35 : vector<1x224xf32> to vector<16x224xf32>
    %37 = arith.mulf %32, %36 : vector<16x224xf32>
    %38 = arith.mulf %37, %24 : vector<16x224xf32>
    %39 = arith.addf %21, %38 : vector<16x224xf32>
    %40 = vector.extract_strided_slice %2 {offsets = [32, 0], sizes = [16, 224], strides = [1, 1]} : vector<192x224xf32> to vector<16x224xf32>
    %41 = vector.extract_strided_slice %2 {offsets = [96, 0], sizes = [16, 224], strides = [1, 1]} : vector<192x224xf32> to vector<16x224xf32>
    %42 = vector.extract_strided_slice %2 {offsets = [160, 0], sizes = [16, 224], strides = [1, 1]} : vector<192x224xf32> to vector<16x224xf32>
    %43 = arith.mulf %40, %41 : vector<16x224xf32>
    %cst_9 = arith.constant 2.500000e-01 : f32
    %44 = vector.broadcast %cst_9 : f32 to vector<16x224xf32>
    %45 = arith.mulf %43, %44 : vector<16x224xf32>
    %cst_10 = arith.constant dense<0xFF800000> : vector<224xf32>
    %46 = vector.multi_reduction <maximumf>, %45, %cst_10 [0] : vector<16x224xf32> to vector<224xf32>
    %47 = vector.shape_cast %46 : vector<224xf32> to vector<1x224xf32>
    %48 = vector.broadcast %47 : vector<1x224xf32> to vector<16x224xf32>
    %49 = arith.subf %45, %48 : vector<16x224xf32>
    %50 = math.exp %49 : vector<16x224xf32>
    %cst_11 = arith.constant dense<0.000000e+00> : vector<224xf32>
    %51 = vector.multi_reduction <add>, %50, %cst_11 [0] : vector<16x224xf32> to vector<224xf32>
    %52 = vector.shape_cast %51 : vector<224xf32> to vector<1x224xf32>
    %53 = tpu.reciprocal %52 {approx = true} : vector<1x224xf32> -> vector<1x224xf32>
    %54 = vector.broadcast %53 : vector<1x224xf32> to vector<16x224xf32>
    %55 = arith.mulf %50, %54 : vector<16x224xf32>
    %56 = arith.mulf %55, %42 : vector<16x224xf32>
    %57 = arith.addf %39, %56 : vector<16x224xf32>
    %58 = vector.extract_strided_slice %2 {offsets = [48, 0], sizes = [16, 224], strides = [1, 1]} : vector<192x224xf32> to vector<16x224xf32>
    %59 = vector.extract_strided_slice %2 {offsets = [112, 0], sizes = [16, 224], strides = [1, 1]} : vector<192x224xf32> to vector<16x224xf32>
    %60 = vector.extract_strided_slice %2 {offsets = [176, 0], sizes = [16, 224], strides = [1, 1]} : vector<192x224xf32> to vector<16x224xf32>
    %61 = arith.mulf %58, %59 : vector<16x224xf32>
    %cst_12 = arith.constant 2.500000e-01 : f32
    %62 = vector.broadcast %cst_12 : f32 to vector<16x224xf32>
    %63 = arith.mulf %61, %62 : vector<16x224xf32>
    %cst_13 = arith.constant dense<0xFF800000> : vector<224xf32>
    %64 = vector.multi_reduction <maximumf>, %63, %cst_13 [0] : vector<16x224xf32> to vector<224xf32>
    %65 = vector.shape_cast %64 : vector<224xf32> to vector<1x224xf32>
    %66 = vector.broadcast %65 : vector<1x224xf32> to vector<16x224xf32>
    %67 = arith.subf %63, %66 : vector<16x224xf32>
    %68 = math.exp %67 : vector<16x224xf32>
    %cst_14 = arith.constant dense<0.000000e+00> : vector<224xf32>
    %69 = vector.multi_reduction <add>, %68, %cst_14 [0] : vector<16x224xf32> to vector<224xf32>
    %70 = vector.shape_cast %69 : vector<224xf32> to vector<1x224xf32>
    %71 = tpu.reciprocal %70 {approx = true} : vector<1x224xf32> -> vector<1x224xf32>
    %72 = vector.broadcast %71 : vector<1x224xf32> to vector<16x224xf32>
    %73 = arith.mulf %68, %72 : vector<16x224xf32>
    %74 = arith.mulf %73, %60 : vector<16x224xf32>
    %75 = arith.addf %57, %74 : vector<16x224xf32>
    %76 = arith.truncf %75 : vector<16x224xf32> to vector<16x224xbf16>
    %c0_15 = arith.constant 0 : index
    %c0_16 = arith.constant 0 : index
    %77 = vector.load %arg3[%c0_15, %c0_16] : memref<16x224xbf16, #tpu.memory_space<vmem>>, vector<16x224xbf16>
    tpu.vector_store %arg3[%c0_15, %c0_16], %76 {strides = array<i32>} : memref<16x224xbf16, #tpu.memory_space<vmem>>, vector<16x224xbf16>,
    return
  }
  func.func @transform_0(%arg0: i32) -> (i32, i32) {
    %c0_i32 = arith.constant 0 : i32
    %c0_i32_0 = arith.constant 0 : i32
    %c0_i32_1 = arith.constant 0 : i32
    return %c0_i32, %c0_i32_0 : i32, i32
  }
  func.func @transform_1(%arg0: i32) -> (i32, i32) {
    %c0_i32 = arith.constant 0 : i32
    %c0_i32_0 = arith.constant 0 : i32
    return %c0_i32, %arg0 : i32, i32
  }
  func.func @transform_2(%arg0: i32) -> (i32, i32) {
    %c0_i32 = arith.constant 0 : i32
    %c0_i32_0 = arith.constant 0 : i32
    return %c0_i32, %arg0 : i32, i32
  }
}

module attributes {stable_mosaic.version = 11 : i64} {
  func.func @_bmm_t_kernel(%arg0: i32, %arg1: i32, %arg2: memref<1x8x16xbf16, #tpu.memory_space<vmem>>, %arg3: memref<1x16x16xbf16, #tpu.memory_space<vmem>>, %arg4: memref<1x8x16xf32, #tpu.memory_space<vmem>>) attributes {dimension_semantics = [#tpu.dimension_semantics<parallel>, #tpu.dimension_semantics<parallel>], iteration_bounds = array<i64: 14, 1>, scalar_prefetch = 0 : i64, scratch_operands = 0 : i64, tpu.core_type = #tpu.core_type<tc>, window_params = [{pipeline_mode = #tpu.pipeline_mode<synchronous>, transform_indices = @transform_0, window_bounds = array<i64: 1, 8, 16>}, {transform_indices = @transform_1, window_bounds = array<i64: 1, 16, 16>}, {transform_indices = @transform_2, window_bounds = array<i64: 1, 8, 16>}]} {
    %c0 = arith.constant 0 : index
    %c0_0 = arith.constant 0 : index
    %c0_1 = arith.constant 0 : index
    %0 = vector.load %arg2[%c0, %c0_0, %c0_1] : memref<1x8x16xbf16, #tpu.memory_space<vmem>>, vector<1x8x16xbf16>
    %1 = vector.shape_cast %0 : vector<1x8x16xbf16> to vector<8x16xbf16>
    %c0_2 = arith.constant 0 : index
    %c0_3 = arith.constant 0 : index
    %c0_4 = arith.constant 0 : index
    %2 = vector.load %arg3[%c0_2, %c0_3, %c0_4] : memref<1x16x16xbf16, #tpu.memory_space<vmem>>, vector<1x16x16xbf16>
    %3 = vector.shape_cast %2 : vector<1x16x16xbf16> to vector<16x16xbf16>
    %cst = arith.constant dense<0.000000e+00> : vector<8x16xf32>
    %4 = tpu.matmul %1, %3, %cst {dimension_numbers = #tpu.dot_dimension_numbers<[1], [0], [0], [1], [0, 0, 1, 1], [], []>} : vector<8x16xbf16>, vector<16x16xbf16>, vector<8x16xf32> -> vector<8x16xf32>
    %c0_5 = arith.constant 0 : index
    %c0_6 = arith.constant 0 : index
    %c0_7 = arith.constant 0 : index
    %5 = vector.load %arg4[%c0_5, %c0_6, %c0_7] : memref<1x8x16xf32, #tpu.memory_space<vmem>>, vector<1x8x16xf32>
    %6 = vector.shape_cast %5 : vector<1x8x16xf32> to vector<8x16xf32>
    %7 = vector.shape_cast %4 : vector<8x16xf32> to vector<1x8x16xf32>
    tpu.vector_store %arg4[%c0_5, %c0_6, %c0_7], %7 {strides = array<i32>} : memref<1x8x16xf32, #tpu.memory_space<vmem>>, vector<1x8x16xf32>,
    return
  }
  func.func @transform_0(%arg0: i32, %arg1: i32) -> (i32, i32, i32) {
    %c0_i32 = arith.constant 0 : i32
    %c0_i32_0 = arith.constant 0 : i32
    %c0_i32_1 = arith.constant 0 : i32
    %c0_i32_2 = arith.constant 0 : i32
    return %c0_i32, %c0_i32_0, %c0_i32_1 : i32, i32, i32
  }
  func.func @transform_1(%arg0: i32, %arg1: i32) -> (i32, i32, i32) {
    %c0_i32 = arith.constant 0 : i32
    %c0_i32_0 = arith.constant 0 : i32
    return %arg0, %c0_i32, %arg1 : i32, i32, i32
  }
  func.func @transform_2(%arg0: i32, %arg1: i32) -> (i32, i32, i32) {
    %c0_i32 = arith.constant 0 : i32
    %c0_i32_0 = arith.constant 0 : i32
    return %arg0, %c0_i32, %arg1 : i32, i32, i32
  }
}

module attributes {stable_mosaic.version = 11 : i64} {
  func.func @_bmm_t_kernel(%arg0: i32, %arg1: i32, %arg2: memref<1x8x18xbf16, #tpu.memory_space<vmem>>, %arg3: memref<1x18x64xbf16, #tpu.memory_space<vmem>>, %arg4: memref<1x8x64xf32, #tpu.memory_space<vmem>>) attributes {dimension_semantics = [#tpu.dimension_semantics<parallel>, #tpu.dimension_semantics<parallel>], iteration_bounds = array<i64: 1, 1>, scalar_prefetch = 0 : i64, scratch_operands = 0 : i64, tpu.core_type = #tpu.core_type<tc>, window_params = [{pipeline_mode = #tpu.pipeline_mode<synchronous>, transform_indices = @transform_0, window_bounds = array<i64: 1, 8, 18>}, {transform_indices = @transform_1, window_bounds = array<i64: 1, 18, 64>}, {transform_indices = @transform_2, window_bounds = array<i64: 1, 8, 64>}]} {
    %c0 = arith.constant 0 : index
    %c0_0 = arith.constant 0 : index
    %c0_1 = arith.constant 0 : index
    %0 = vector.load %arg2[%c0, %c0_0, %c0_1] : memref<1x8x18xbf16, #tpu.memory_space<vmem>>, vector<1x8x18xbf16>
    %1 = vector.shape_cast %0 : vector<1x8x18xbf16> to vector<8x18xbf16>
    %c0_2 = arith.constant 0 : index
    %c0_3 = arith.constant 0 : index
    %c0_4 = arith.constant 0 : index
    %2 = vector.load %arg3[%c0_2, %c0_3, %c0_4] : memref<1x18x64xbf16, #tpu.memory_space<vmem>>, vector<1x18x64xbf16>
    %3 = vector.shape_cast %2 : vector<1x18x64xbf16> to vector<18x64xbf16>
    %cst = arith.constant dense<0.000000e+00> : vector<8x64xf32>
    %4 = tpu.matmul %1, %3, %cst {dimension_numbers = #tpu.dot_dimension_numbers<[1], [0], [0], [1], [0, 0, 1, 1], [], []>} : vector<8x18xbf16>, vector<18x64xbf16>, vector<8x64xf32> -> vector<8x64xf32>
    %c0_5 = arith.constant 0 : index
    %c0_6 = arith.constant 0 : index
    %c0_7 = arith.constant 0 : index
    %5 = vector.load %arg4[%c0_5, %c0_6, %c0_7] : memref<1x8x64xf32, #tpu.memory_space<vmem>>, vector<1x8x64xf32>
    %6 = vector.shape_cast %5 : vector<1x8x64xf32> to vector<8x64xf32>
    %7 = vector.shape_cast %4 : vector<8x64xf32> to vector<1x8x64xf32>
    tpu.vector_store %arg4[%c0_5, %c0_6, %c0_7], %7 {strides = array<i32>} : memref<1x8x64xf32, #tpu.memory_space<vmem>>, vector<1x8x64xf32>,
    return
  }
  func.func @transform_0(%arg0: i32, %arg1: i32) -> (i32, i32, i32) {
    %c0_i32 = arith.constant 0 : i32
    %c0_i32_0 = arith.constant 0 : i32
    %c0_i32_1 = arith.constant 0 : i32
    %c0_i32_2 = arith.constant 0 : i32
    return %c0_i32, %c0_i32_0, %c0_i32_1 : i32, i32, i32
  }
  func.func @transform_1(%arg0: i32, %arg1: i32) -> (i32, i32, i32) {
    %c0_i32 = arith.constant 0 : i32
    %c0_i32_0 = arith.constant 0 : i32
    %c0_i32_1 = arith.constant 0 : i32
    return %c0_i32, %c0_i32_0, %arg1 : i32, i32, i32
  }
  func.func @transform_2(%arg0: i32, %arg1: i32) -> (i32, i32, i32) {
    %c0_i32 = arith.constant 0 : i32
    %c0_i32_0 = arith.constant 0 : i32
    return %arg0, %c0_i32, %arg1 : i32, i32, i32
  }
}

module attributes {stable_mosaic.version = 11 : i64} {
  func.func @_bmm_t_kernel(%arg0: i32, %arg1: i32, %arg2: memref<1x8x50xbf16, #tpu.memory_space<vmem>>, %arg3: memref<1x50x64xbf16, #tpu.memory_space<vmem>>, %arg4: memref<1x8x64xf32, #tpu.memory_space<vmem>>) attributes {dimension_semantics = [#tpu.dimension_semantics<parallel>, #tpu.dimension_semantics<parallel>], iteration_bounds = array<i64: 1, 1>, scalar_prefetch = 0 : i64, scratch_operands = 0 : i64, tpu.core_type = #tpu.core_type<tc>, window_params = [{pipeline_mode = #tpu.pipeline_mode<synchronous>, transform_indices = @transform_0, window_bounds = array<i64: 1, 8, 50>}, {transform_indices = @transform_1, window_bounds = array<i64: 1, 50, 64>}, {transform_indices = @transform_2, window_bounds = array<i64: 1, 8, 64>}]} {
    %c0 = arith.constant 0 : index
    %c0_0 = arith.constant 0 : index
    %c0_1 = arith.constant 0 : index
    %0 = vector.load %arg2[%c0, %c0_0, %c0_1] : memref<1x8x50xbf16, #tpu.memory_space<vmem>>, vector<1x8x50xbf16>
    %1 = vector.shape_cast %0 : vector<1x8x50xbf16> to vector<8x50xbf16>
    %c0_2 = arith.constant 0 : index
    %c0_3 = arith.constant 0 : index
    %c0_4 = arith.constant 0 : index
    %2 = vector.load %arg3[%c0_2, %c0_3, %c0_4] : memref<1x50x64xbf16, #tpu.memory_space<vmem>>, vector<1x50x64xbf16>
    %3 = vector.shape_cast %2 : vector<1x50x64xbf16> to vector<50x64xbf16>
    %cst = arith.constant dense<0.000000e+00> : vector<8x64xf32>
    %4 = tpu.matmul %1, %3, %cst {dimension_numbers = #tpu.dot_dimension_numbers<[1], [0], [0], [1], [0, 0, 1, 1], [], []>} : vector<8x50xbf16>, vector<50x64xbf16>, vector<8x64xf32> -> vector<8x64xf32>
    %c0_5 = arith.constant 0 : index
    %c0_6 = arith.constant 0 : index
    %c0_7 = arith.constant 0 : index
    %5 = vector.load %arg4[%c0_5, %c0_6, %c0_7] : memref<1x8x64xf32, #tpu.memory_space<vmem>>, vector<1x8x64xf32>
    %6 = vector.shape_cast %5 : vector<1x8x64xf32> to vector<8x64xf32>
    %7 = vector.shape_cast %4 : vector<8x64xf32> to vector<1x8x64xf32>
    tpu.vector_store %arg4[%c0_5, %c0_6, %c0_7], %7 {strides = array<i32>} : memref<1x8x64xf32, #tpu.memory_space<vmem>>, vector<1x8x64xf32>,
    return
  }
  func.func @transform_0(%arg0: i32, %arg1: i32) -> (i32, i32, i32) {
    %c0_i32 = arith.constant 0 : i32
    %c0_i32_0 = arith.constant 0 : i32
    %c0_i32_1 = arith.constant 0 : i32
    %c0_i32_2 = arith.constant 0 : i32
    return %c0_i32, %c0_i32_0, %c0_i32_1 : i32, i32, i32
  }
  func.func @transform_1(%arg0: i32, %arg1: i32) -> (i32, i32, i32) {
    %c0_i32 = arith.constant 0 : i32
    %c0_i32_0 = arith.constant 0 : i32
    %c0_i32_1 = arith.constant 0 : i32
    return %c0_i32, %c0_i32_0, %arg1 : i32, i32, i32
  }
  func.func @transform_2(%arg0: i32, %arg1: i32) -> (i32, i32, i32) {
    %c0_i32 = arith.constant 0 : i32
    %c0_i32_0 = arith.constant 0 : i32
    return %arg0, %c0_i32, %arg1 : i32, i32, i32
  }
}

module attributes {stable_mosaic.version = 11 : i64} {
  func.func @_bmm_t_kernel(%arg0: i32, %arg1: i32, %arg2: memref<1x8x162xbf16, #tpu.memory_space<vmem>>, %arg3: memref<1x162x96xbf16, #tpu.memory_space<vmem>>, %arg4: memref<1x8x96xf32, #tpu.memory_space<vmem>>) attributes {dimension_semantics = [#tpu.dimension_semantics<parallel>, #tpu.dimension_semantics<parallel>], iteration_bounds = array<i64: 1, 1>, scalar_prefetch = 0 : i64, scratch_operands = 0 : i64, tpu.core_type = #tpu.core_type<tc>, window_params = [{pipeline_mode = #tpu.pipeline_mode<synchronous>, transform_indices = @transform_0, window_bounds = array<i64: 1, 8, 162>}, {transform_indices = @transform_1, window_bounds = array<i64: 1, 162, 96>}, {transform_indices = @transform_2, window_bounds = array<i64: 1, 8, 96>}]} {
    %c0 = arith.constant 0 : index
    %c0_0 = arith.constant 0 : index
    %c0_1 = arith.constant 0 : index
    %0 = vector.load %arg2[%c0, %c0_0, %c0_1] : memref<1x8x162xbf16, #tpu.memory_space<vmem>>, vector<1x8x162xbf16>
    %1 = vector.shape_cast %0 : vector<1x8x162xbf16> to vector<8x162xbf16>
    %c0_2 = arith.constant 0 : index
    %c0_3 = arith.constant 0 : index
    %c0_4 = arith.constant 0 : index
    %2 = vector.load %arg3[%c0_2, %c0_3, %c0_4] : memref<1x162x96xbf16, #tpu.memory_space<vmem>>, vector<1x162x96xbf16>
    %3 = vector.shape_cast %2 : vector<1x162x96xbf16> to vector<162x96xbf16>
    %cst = arith.constant dense<0.000000e+00> : vector<8x96xf32>
    %4 = tpu.matmul %1, %3, %cst {dimension_numbers = #tpu.dot_dimension_numbers<[1], [0], [0], [1], [0, 0, 1, 1], [], []>} : vector<8x162xbf16>, vector<162x96xbf16>, vector<8x96xf32> -> vector<8x96xf32>
    %c0_5 = arith.constant 0 : index
    %c0_6 = arith.constant 0 : index
    %c0_7 = arith.constant 0 : index
    %5 = vector.load %arg4[%c0_5, %c0_6, %c0_7] : memref<1x8x96xf32, #tpu.memory_space<vmem>>, vector<1x8x96xf32>
    %6 = vector.shape_cast %5 : vector<1x8x96xf32> to vector<8x96xf32>
    %7 = vector.shape_cast %4 : vector<8x96xf32> to vector<1x8x96xf32>
    tpu.vector_store %arg4[%c0_5, %c0_6, %c0_7], %7 {strides = array<i32>} : memref<1x8x96xf32, #tpu.memory_space<vmem>>, vector<1x8x96xf32>,
    return
  }
  func.func @transform_0(%arg0: i32, %arg1: i32) -> (i32, i32, i32) {
    %c0_i32 = arith.constant 0 : i32
    %c0_i32_0 = arith.constant 0 : i32
    %c0_i32_1 = arith.constant 0 : i32
    %c0_i32_2 = arith.constant 0 : i32
    return %c0_i32, %c0_i32_0, %c0_i32_1 : i32, i32, i32
  }
  func.func @transform_1(%arg0: i32, %arg1: i32) -> (i32, i32, i32) {
    %c0_i32 = arith.constant 0 : i32
    %c0_i32_0 = arith.constant 0 : i32
    %c0_i32_1 = arith.constant 0 : i32
    return %c0_i32, %c0_i32_0, %arg1 : i32, i32, i32
  }
  func.func @transform_2(%arg0: i32, %arg1: i32) -> (i32, i32, i32) {
    %c0_i32 = arith.constant 0 : i32
    %c0_i32_0 = arith.constant 0 : i32
    return %arg0, %c0_i32, %arg1 : i32, i32, i32
  }
}

</mosaic_0001>

<llo_original>
// kernel: sub_cost_volum_forward.10
$region0: #{sub_cost_volum_forward.10}
  #allocation0 [shape = 'u32[]', space=smem, size = 0x4, offset = 0x4, fixed_abs, tag = 'smem constant byte address 0x4 - core index']
  #allocation1 [shape = 'u32[144,128]{1,0:T(1,128)}', space=vmem, size = 0x12000, scoped, tag = 'internal scratch']
  %s0 = inlined_call_operand.vmem [shape: bf16[4,4,8], index: 0, kind: input, shape index: {}]
  %s1 = inlined_call_operand.vmem [shape: bf16[4,8,64], index: 1, kind: input, shape index: {}]
  %s2 = inlined_call_operand.vmem [shape: bf16[4,4,64], index: 2, kind: output, shape index: {}]
  %s3 = sld [smem:[#allocation0]]
  $region41: #{sub_cost_volum_forward.10} parent=0
    _
  %s5 = ssub.s32 1, %s3
  %s6 = scalar_select 0, %s5, %s3
  loop: start=0, step=1, limit=6
  $region2: #{sub_cost_volum_forward.10} parent=0 // loop_pre_header
    _
  $region3: #{sub_cost_volum_forward.10} parent=0 // loop_header
    %s8 = sphi 0, %s12
    %p9 = scmp.ge.s32.totalorder %s8, 6
    %s15 = sphi 0, %s27
    %s16 = sphi 0, %s23
    %s17 = sphi 0, %s15
    %s18 = sphi 0, %s16
    %s19 = sphi 0, %s17
    %s20 = sphi 0, %s18
    %s30 = sphi 0, %s32
    %s33 = sphi 0, %s30
    %s34 = sphi 0, %s33
    %s50 = sphi 0, %s34
    %s58 = sphi 0, %s60
    %s61 = sphi 0, %s58
    %s62 = sphi 0, %s61
    %s78 = sphi 0, %s62
    %s86 = sphi 0, %s88
    %s89 = sphi 0, %s86
    %s90 = sphi 0, %s89
    %s106 = sphi 0, %s90
  $region4: #{sub_cost_volum_forward.10} parent=0 // loop_header_branch
    %11 = sbr.rel (%p9) target = $region8
  $region5: #{sub_cost_volum_forward.10} parent=0 // loop_body
    %s13 = ssub.s32 %s8, 1
    %s14 = ssub.s32 %s8, 2
    %s21 = sadd.s32 1, %s16
    %p22 = scmp.ge.s32.totalorder %s21, 1
    %s23 = scalar_select %p22, 0, %s21
    %s24 = sadd.s32 1, %s15
    %s25 = scalar_select %p22, %s24, %s15
    %p26 = scmp.ge.s32.totalorder %s25, 4
    %s27 = scalar_select %p26, 0, %s25
    %s28 = ssub.s32 %s15, %s27
    %p29 = scmp.eq.s32.totalorder %s28, 0
    %s31 = sadd.s32 %s30, 1
    %s32 = scalar_select %p29, %s30, %s31
    %p35 = pneg %p29
    %p36 = scmp.eq.s32.totalorder %s8, 3
    %p37 = por %p35, %p36
    %p38 = scmp.ne.s32.totalorder %s30, %s33
    %p39 = scmp.eq.s32.totalorder %s8, 0
    %p40 = por %p38, %p39
    %p41 = scmp.ne.s32.totalorder %s30, %s33
    %p42 = scmp.eq.s32.totalorder %s13, 3
    %p43 = por %p41, %p42
    %p44 = scmp.ne.s32.totalorder %s33, %s34
    %p45 = scmp.eq.s32.totalorder %s13, 0
    %p46 = por %p44, %p45
    %p47 = scmp.ne.s32.totalorder %s33, %s34
    %p48 = scmp.eq.s32.totalorder %s14, 3
    %p49 = por %p47, %p48
    %p51 = scmp.ne.s32.totalorder %s34, %s50
    %p52 = scmp.eq.s32.totalorder %s14, 0
    %p53 = por %p51, %p52
    %s54 = ssub.s32 %s15, %s27
    %s55 = ssub.s32 %s16, %s23
    %s56 = sor.u32 %s54, %s55
    %p57 = scmp.eq.s32.totalorder %s56, 0
    %s59 = sadd.s32 %s58, 1
    %s60 = scalar_select %p57, %s58, %s59
    %p63 = pneg %p57
    %p64 = scmp.eq.s32.totalorder %s8, 3
    %p65 = por %p63, %p64
    %p66 = scmp.ne.s32.totalorder %s58, %s61
    %p67 = scmp.eq.s32.totalorder %s8, 0
    %p68 = por %p66, %p67
    %p69 = scmp.ne.s32.totalorder %s58, %s61
    %p70 = scmp.eq.s32.totalorder %s13, 3
    %p71 = por %p69, %p70
    %p72 = scmp.ne.s32.totalorder %s61, %s62
    %p73 = scmp.eq.s32.totalorder %s13, 0
    %p74 = por %p72, %p73
    %p75 = scmp.ne.s32.totalorder %s61, %s62
    %p76 = scmp.eq.s32.totalorder %s14, 3
    %p77 = por %p75, %p76
    %p79 = scmp.ne.s32.totalorder %s62, %s78
    %p80 = scmp.eq.s32.totalorder %s14, 0
    %p81 = por %p79, %p80
    %s82 = ssub.s32 %s15, %s27
    %s83 = ssub.s32 %s16, %s23
    %s84 = sor.u32 %s82, %s83
    %p85 = scmp.eq.s32.totalorder %s84, 0
    %s87 = sadd.s32 %s86, 1
    %s88 = scalar_select %p85, %s86, %s87
    %p91 = pneg %p85
    %p92 = scmp.eq.s32.totalorder %s8, 3
    %p93 = por %p91, %p92
    %p94 = scmp.ne.s32.totalorder %s86, %s89
    %p95 = scmp.eq.s32.totalorder %s8, 0
    %p96 = por %p94, %p95
    %p97 = scmp.ne.s32.totalorder %s86, %s89
    %p98 = scmp.eq.s32.totalorder %s13, 3
    %p99 = por %p97, %p98
    %p100 = scmp.ne.s32.totalorder %s89, %s90
    %p101 = scmp.eq.s32.totalorder %s13, 0
    %p102 = por %p100, %p101
    %p103 = scmp.ne.s32.totalorder %s89, %s90
    %p104 = scmp.eq.s32.totalorder %s14, 3
    %p105 = por %p103, %p104
    %p107 = scmp.ne.s32.totalorder %s90, %s106
    %p108 = scmp.eq.s32.totalorder %s14, 0
    %p109 = por %p107, %p108
    %p110 = scmp.le.s32.totalorder 1, %s8
    %p111 = scmp.lt.s32.totalorder %s8, 5
    %p112 = pnand %p110, %p111
    %p113 = pneg %p112
    // Predicated region
    $region9: #{sub_cost_volum_forward.10} parent=5 // pred_check
      _
    $region10: #{sub_cost_volum_forward.10} parent=5 // pred_check_branch
      %115 = sbr.rel (%p112) target = $region12
    $region11: #{sub_cost_volum_forward.10} parent=5 // pred_region
      %s116 = ssub.s32 %s8, 1
    $region12: #{sub_cost_volum_forward.10} parent=5 // pred_fallthru
      _
    %p117 = scmp.lt.s32.totalorder %s8, 4
    // Predicated region
    $region13: #{sub_cost_volum_forward.10} parent=5 // pred_check
      %p118 = pneg %p117
    $region14: #{sub_cost_volum_forward.10} parent=5 // pred_check_branch
      %120 = sbr.rel (%p118) target = $region16
    $region15: #{sub_cost_volum_forward.10} parent=5 // pred_region
      // Predicated region
      $region17: #{sub_cost_volum_forward.10} parent=15 // pred_check
        %p121 = pneg %p40
      $region18: #{sub_cost_volum_forward.10} parent=15 // pred_check_branch
        %123 = sbr.rel (%p121) target = $region20
      $region19: #{sub_cost_volum_forward.10} parent=15 // pred_region
        %p124 = scmp.lt.s32.totalorder %s15, 3
        %s125 = scalar_select %p124, %s15, 3
        %s126 = smul.addr %s125, 2
        %s127 = scalar_lea.vmem %s0, %s126
      $region20: #{sub_cost_volum_forward.10} parent=15 // pred_fallthru
        _
      // Predicated region
      $region21: #{sub_cost_volum_forward.10} parent=15 // pred_check
        %p128 = pneg %p68
      $region22: #{sub_cost_volum_forward.10} parent=15 // pred_check_branch
        %130 = sbr.rel (%p128) target = $region24
      $region23: #{sub_cost_volum_forward.10} parent=15 // pred_region
        %p131 = scmp.lt.s32.totalorder %s15, 3
        %s132 = scalar_select %p131, %s15, 3
        %p133 = scmp.lt.s32.totalorder %s16, 0
        %s134 = scalar_select %p133, %s16, 0
        %s135 = sadd.s32 %s134, %s132
        %s136 = smul.addr %s135, 4
        %s137 = scalar_lea.vmem %s1, %s136
      $region24: #{sub_cost_volum_forward.10} parent=15 // pred_fallthru
        _
    $region16: #{sub_cost_volum_forward.10} parent=5 // pred_fallthru
      _
    %p138 = scmp.le.s32.totalorder 1, %s8
    %p139 = scmp.lt.s32.totalorder %s8, 5
    %p140 = pnand %p138, %p139
    %p141 = pneg %p140
    // Predicated region
    $region25: #{sub_cost_volum_forward.10} parent=5 // pred_check
      _
    $region26: #{sub_cost_volum_forward.10} parent=5 // pred_check_branch
      %143 = sbr.rel (%p140) target = $region28
    $region27: #{sub_cost_volum_forward.10} parent=5 // pred_region
      %s144 = ssub.s32 %s8, 1
      %p145 = scmp.lt.s32.totalorder %s17, 3
      %s146 = scalar_select %p145, %s17, 3
      %s147 = smul.addr %s146, 2
      %s148 = scalar_lea.vmem %s0, %s147
      %p149 = pneg %p46
      %p150 = pneg %p43
      %p151 = scmp.lt.s32.totalorder %s17, 3
      %s152 = scalar_select %p151, %s17, 3
      %p153 = scmp.lt.s32.totalorder %s18, 0
      %s154 = scalar_select %p153, %s18, 0
      %s155 = sadd.s32 %s154, %s152
      %s156 = smul.addr %s155, 4
      %s157 = scalar_lea.vmem %s1, %s156
      %p158 = pneg %p74
      %p159 = pneg %p71
      %p160 = pneg %p102
      %p161 = pneg %p99
      %p162 = scmp.lt.s32.totalorder %s17, 3
      %s163 = scalar_select %p162, %s17, 3
      %p164 = scmp.lt.s32.totalorder %s18, 0
      %s165 = scalar_select %p164, %s18, 0
      %s166 = sadd.s32 %s165, %s163
      %s167 = smul.addr %s166, 2
      %s168 = scalar_lea.vmem %s2, %s167
      %p169 = scmp.lt.s32.totalorder %s17, 3
      %s170 = scalar_select %p169, %s17, 3
      %s171 = smul.addr %s170, 2
      %s172 = scalar_lea.vmem %s0, %s171
      %p173 = scmp.lt.s32.totalorder %s17, 3
      %s174 = scalar_select %p173, %s17, 3
      %p175 = scmp.lt.s32.totalorder %s18, 0
      %s176 = scalar_select %p175, %s18, 0
      %s177 = sadd.s32 %s176, %s174
      %s178 = smul.addr %s177, 4
      %s179 = scalar_lea.vmem %s1, %s178
      %p180 = scmp.lt.s32.totalorder %s17, 3
      %s181 = scalar_select %p180, %s17, 3
      %p182 = scmp.lt.s32.totalorder %s18, 0
      %s183 = scalar_select %p182, %s18, 0
      %s184 = sadd.s32 %s183, %s181
      %s185 = smul.addr %s184, 2
      %s186 = scalar_lea.vmem %s2, %s185
      %v188 = vld [vmem:[%s172] sm:$0x3]
      %v189 = vld [vmem:[%s179] sm:$0xf]
      %vm190 = vcmask 64512
      %v192 = vsel %vm190, %v188, 0
      %vm194 = vcmask 1043456
      %v196 = vsel %vm194, %v189, 0
      %198 = vmatprep.subr.bf16.mxu0 0
      %199 = vmatpush1.bf16.msra.mxu0 0
      %200 = vmatprep.subr.bf16.mxu0 0
      %201 = vmatpush1.bf16.msra.mxu0 0
      %202 = vmatprep.subr.bf16.mxu0 0
      %203 = vmatpush1.bf16.msra.mxu0 0
      %204 = vmatprep.subr.bf16.mxu0 0
      %205 = vmatpush1.bf16.msra.mxu0 0
      %206 = vmatprep.subr.bf16.mxu0 0
      %207 = vmatpush1.bf16.msra.mxu0 0
      %208 = vmatprep.subr.bf16.mxu0 0
      %209 = vmatpush1.bf16.msra.mxu0 0
      %210 = vmatprep.subr.bf16.mxu0 0
      %211 = vmatpush1.bf16.msra.mxu0 0
      %212 = vmatprep.subr.bf16.mxu0 0
      %213 = vmatpush1.bf16.msra.mxu0 %v196
      %214 = vmatprep.subr.bf16.mxu0 0
      %215 = vmatpush2.bf16.msra.mxu0 0
      %216 = vmatprep.subr.bf16.mxu0 0
      %217 = vmatpush2.bf16.msra.mxu0 0
      %218 = vmatprep.subr.bf16.mxu0 0
      %219 = vmatpush2.bf16.msra.mxu0 0
      %220 = vmatprep.subr.bf16.mxu0 0
      %221 = vmatpush2.bf16.msra.mxu0 0
      %222 = vmatprep.subr.bf16.mxu0 0
      %223 = vmatpush2.bf16.msra.mxu0 0
      %224 = vmatprep.subr.bf16.mxu0 0
      %225 = vmatpush2.bf16.msra.mxu0 0
      %226 = vmatprep.subr.bf16.mxu0 0
      %227 = vmatpush2.bf16.msra.mxu0 0
      %228 = vmatprep.subr.bf16.mxu0 0
      %229 = vmatpush2.bf16.msra.mxu0 0
      %230 = vmatprep.mubr.bf16.mxu0 0
      %231 = vmatmul.mubr.bf16.gmra.mxu0 %v192
      %v232 = vpop.f32.mrf.mxu0
      %v233 = vadd.f32 0.0, %v232
      %v234 = vpop.f32.mrf.mxu0
      %v235 = vpop.f32.mrf.mxu0
      %v236 = vpop.f32.mrf.mxu0
      %237 = vdwg.mxu0
      %v238 = vpack.c.bf16 %v233, %v233
      %vm239 = vcmask 517120
      %240 = vst.msk [vmem:[%s186] sm:$0x3] %vm239, %v238
      %p241 = scmp.lt.s32.totalorder %s17, 3
      %s242 = scalar_select %p241, %s17, 3
      %p243 = scmp.lt.s32.totalorder %s18, 0
      %s244 = scalar_select %p243, %s18, 0
      %s245 = sadd.s32 %s244, %s242
      %s246 = smul.addr %s245, 2
      %s247 = scalar_lea.vmem %s2, %s246
      // Predicated region
      $region29: #{sub_cost_volum_forward.10} parent=27 // pred_check
        %p248 = pneg %p99
      $region30: #{sub_cost_volum_forward.10} parent=27 // pred_check_branch
        %250 = sbr.rel (%p248) target = $region32
      $region31: #{sub_cost_volum_forward.10} parent=27 // pred_region
        _
      $region32: #{sub_cost_volum_forward.10} parent=27 // pred_fallthru
        _
    $region28: #{sub_cost_volum_forward.10} parent=5 // pred_fallthru
      _
    %p251 = scmp.le.s32.totalorder 2, %s8
    // Predicated region
    $region33: #{sub_cost_volum_forward.10} parent=5 // pred_check
      %p252 = pneg %p251
    $region34: #{sub_cost_volum_forward.10} parent=5 // pred_check_branch
      %254 = sbr.rel (%p252) target = $region36
    $region35: #{sub_cost_volum_forward.10} parent=5 // pred_region
      %s255 = ssub.s32 %s8, 2
      // Predicated region
      $region37: #{sub_cost_volum_forward.10} parent=35 // pred_check
        %p256 = pneg %p105
      $region38: #{sub_cost_volum_forward.10} parent=35 // pred_check_branch
        %258 = sbr.rel (%p256) target = $region40
      $region39: #{sub_cost_volum_forward.10} parent=35 // pred_region
        %p259 = scmp.lt.s32.totalorder %s19, 3
        %s260 = scalar_select %p259, %s19, 3
        %p261 = scmp.lt.s32.totalorder %s20, 0
        %s262 = scalar_select %p261, %s20, 0
        %s263 = sadd.s32 %s262, %s260
        %s264 = smul.addr %s263, 2
        %s265 = scalar_lea.vmem %s2, %s264
      $region40: #{sub_cost_volum_forward.10} parent=35 // pred_fallthru
        _
    $region36: #{sub_cost_volum_forward.10} parent=5 // pred_fallthru
      _
  $region6: #{sub_cost_volum_forward.10} parent=0 // loop_footer
    %s12 = sadd.s32 1, %s8
  $region7: #{sub_cost_volum_forward.10} parent=0 // loop_footer_branch
    %7 = sbr.rel target = $region3
  $region8: #{sub_cost_volum_forward.10} parent=0 // loop_exit
    _

// kernel: sub_cost_volum_forward.9
$region0: #{sub_cost_volum_forward.9}
  #allocation0 [shape = 'u32[]', space=smem, size = 0x4, offset = 0x4, fixed_abs, tag = 'smem constant byte address 0x4 - core index']
  #allocation1 [shape = 'u32[144,128]{1,0:T(1,128)}', space=vmem, size = 0x12000, scoped, tag = 'internal scratch']
  %s0 = inlined_call_operand.vmem [shape: bf16[4,4,18], index: 0, kind: input, shape index: {}]
  %s1 = inlined_call_operand.vmem [shape: bf16[4,18,64], index: 1, kind: input, shape index: {}]
  %s2 = inlined_call_operand.vmem [shape: bf16[4,4,64], index: 2, kind: output, shape index: {}]
  %s3 = sld [smem:[#allocation0]]
  $region41: #{sub_cost_volum_forward.9} parent=0
    _
  %s5 = ssub.s32 1, %s3
  %s6 = scalar_select 0, %s5, %s3
  loop: start=0, step=1, limit=6
  $region2: #{sub_cost_volum_forward.9} parent=0 // loop_pre_header
    _
  $region3: #{sub_cost_volum_forward.9} parent=0 // loop_header
    %s8 = sphi 0, %s12
    %p9 = scmp.ge.s32.totalorder %s8, 6
    %s15 = sphi 0, %s27
    %s16 = sphi 0, %s23
    %s17 = sphi 0, %s15
    %s18 = sphi 0, %s16
    %s19 = sphi 0, %s17
    %s20 = sphi 0, %s18
    %s30 = sphi 0, %s32
    %s33 = sphi 0, %s30
    %s34 = sphi 0, %s33
    %s50 = sphi 0, %s34
    %s58 = sphi 0, %s60
    %s61 = sphi 0, %s58
    %s62 = sphi 0, %s61
    %s78 = sphi 0, %s62
    %s86 = sphi 0, %s88
    %s89 = sphi 0, %s86
    %s90 = sphi 0, %s89
    %s106 = sphi 0, %s90
  $region4: #{sub_cost_volum_forward.9} parent=0 // loop_header_branch
    %11 = sbr.rel (%p9) target = $region8
  $region5: #{sub_cost_volum_forward.9} parent=0 // loop_body
    %s13 = ssub.s32 %s8, 1
    %s14 = ssub.s32 %s8, 2
    %s21 = sadd.s32 1, %s16
    %p22 = scmp.ge.s32.totalorder %s21, 1
    %s23 = scalar_select %p22, 0, %s21
    %s24 = sadd.s32 1, %s15
    %s25 = scalar_select %p22, %s24, %s15
    %p26 = scmp.ge.s32.totalorder %s25, 4
    %s27 = scalar_select %p26, 0, %s25
    %s28 = ssub.s32 %s15, %s27
    %p29 = scmp.eq.s32.totalorder %s28, 0
    %s31 = sadd.s32 %s30, 1
    %s32 = scalar_select %p29, %s30, %s31
    %p35 = pneg %p29
    %p36 = scmp.eq.s32.totalorder %s8, 3
    %p37 = por %p35, %p36
    %p38 = scmp.ne.s32.totalorder %s30, %s33
    %p39 = scmp.eq.s32.totalorder %s8, 0
    %p40 = por %p38, %p39
    %p41 = scmp.ne.s32.totalorder %s30, %s33
    %p42 = scmp.eq.s32.totalorder %s13, 3
    %p43 = por %p41, %p42
    %p44 = scmp.ne.s32.totalorder %s33, %s34
    %p45 = scmp.eq.s32.totalorder %s13, 0
    %p46 = por %p44, %p45
    %p47 = scmp.ne.s32.totalorder %s33, %s34
    %p48 = scmp.eq.s32.totalorder %s14, 3
    %p49 = por %p47, %p48
    %p51 = scmp.ne.s32.totalorder %s34, %s50
    %p52 = scmp.eq.s32.totalorder %s14, 0
    %p53 = por %p51, %p52
    %s54 = ssub.s32 %s15, %s27
    %s55 = ssub.s32 %s16, %s23
    %s56 = sor.u32 %s54, %s55
    %p57 = scmp.eq.s32.totalorder %s56, 0
    %s59 = sadd.s32 %s58, 1
    %s60 = scalar_select %p57, %s58, %s59
    %p63 = pneg %p57
    %p64 = scmp.eq.s32.totalorder %s8, 3
    %p65 = por %p63, %p64
    %p66 = scmp.ne.s32.totalorder %s58, %s61
    %p67 = scmp.eq.s32.totalorder %s8, 0
    %p68 = por %p66, %p67
    %p69 = scmp.ne.s32.totalorder %s58, %s61
    %p70 = scmp.eq.s32.totalorder %s13, 3
    %p71 = por %p69, %p70
    %p72 = scmp.ne.s32.totalorder %s61, %s62
    %p73 = scmp.eq.s32.totalorder %s13, 0
    %p74 = por %p72, %p73
    %p75 = scmp.ne.s32.totalorder %s61, %s62
    %p76 = scmp.eq.s32.totalorder %s14, 3
    %p77 = por %p75, %p76
    %p79 = scmp.ne.s32.totalorder %s62, %s78
    %p80 = scmp.eq.s32.totalorder %s14, 0
    %p81 = por %p79, %p80
    %s82 = ssub.s32 %s15, %s27
    %s83 = ssub.s32 %s16, %s23
    %s84 = sor.u32 %s82, %s83
    %p85 = scmp.eq.s32.totalorder %s84, 0
    %s87 = sadd.s32 %s86, 1
    %s88 = scalar_select %p85, %s86, %s87
    %p91 = pneg %p85
    %p92 = scmp.eq.s32.totalorder %s8, 3
    %p93 = por %p91, %p92
    %p94 = scmp.ne.s32.totalorder %s86, %s89
    %p95 = scmp.eq.s32.totalorder %s8, 0
    %p96 = por %p94, %p95
    %p97 = scmp.ne.s32.totalorder %s86, %s89
    %p98 = scmp.eq.s32.totalorder %s13, 3
    %p99 = por %p97, %p98
    %p100 = scmp.ne.s32.totalorder %s89, %s90
    %p101 = scmp.eq.s32.totalorder %s13, 0
    %p102 = por %p100, %p101
    %p103 = scmp.ne.s32.totalorder %s89, %s90
    %p104 = scmp.eq.s32.totalorder %s14, 3
    %p105 = por %p103, %p104
    %p107 = scmp.ne.s32.totalorder %s90, %s106
    %p108 = scmp.eq.s32.totalorder %s14, 0
    %p109 = por %p107, %p108
    %p110 = scmp.le.s32.totalorder 1, %s8
    %p111 = scmp.lt.s32.totalorder %s8, 5
    %p112 = pnand %p110, %p111
    %p113 = pneg %p112
    // Predicated region
    $region9: #{sub_cost_volum_forward.9} parent=5 // pred_check
      _
    $region10: #{sub_cost_volum_forward.9} parent=5 // pred_check_branch
      %115 = sbr.rel (%p112) target = $region12
    $region11: #{sub_cost_volum_forward.9} parent=5 // pred_region
      %s116 = ssub.s32 %s8, 1
    $region12: #{sub_cost_volum_forward.9} parent=5 // pred_fallthru
      _
    %p117 = scmp.lt.s32.totalorder %s8, 4
    // Predicated region
    $region13: #{sub_cost_volum_forward.9} parent=5 // pred_check
      %p118 = pneg %p117
    $region14: #{sub_cost_volum_forward.9} parent=5 // pred_check_branch
      %120 = sbr.rel (%p118) target = $region16
    $region15: #{sub_cost_volum_forward.9} parent=5 // pred_region
      // Predicated region
      $region17: #{sub_cost_volum_forward.9} parent=15 // pred_check
        %p121 = pneg %p40
      $region18: #{sub_cost_volum_forward.9} parent=15 // pred_check_branch
        %123 = sbr.rel (%p121) target = $region20
      $region19: #{sub_cost_volum_forward.9} parent=15 // pred_region
        %p124 = scmp.lt.s32.totalorder %s15, 3
        %s125 = scalar_select %p124, %s15, 3
        %s126 = smul.addr %s125, 2
        %s127 = scalar_lea.vmem %s0, %s126
      $region20: #{sub_cost_volum_forward.9} parent=15 // pred_fallthru
        _
      // Predicated region
      $region21: #{sub_cost_volum_forward.9} parent=15 // pred_check
        %p128 = pneg %p68
      $region22: #{sub_cost_volum_forward.9} parent=15 // pred_check_branch
        %130 = sbr.rel (%p128) target = $region24
      $region23: #{sub_cost_volum_forward.9} parent=15 // pred_region
        %p131 = scmp.lt.s32.totalorder %s15, 3
        %s132 = scalar_select %p131, %s15, 3
        %p133 = scmp.lt.s32.totalorder %s16, 0
        %s134 = scalar_select %p133, %s16, 0
        %s135 = smul.addr %s132, 3
        %s136 = sadd.s32 %s134, %s135
        %s137 = smul.addr %s136, 4
        %s138 = scalar_lea.vmem %s1, %s137
      $region24: #{sub_cost_volum_forward.9} parent=15 // pred_fallthru
        _
    $region16: #{sub_cost_volum_forward.9} parent=5 // pred_fallthru
      _
    %p139 = scmp.le.s32.totalorder 1, %s8
    %p140 = scmp.lt.s32.totalorder %s8, 5
    %p141 = pnand %p139, %p140
    %p142 = pneg %p141
    // Predicated region
    $region25: #{sub_cost_volum_forward.9} parent=5 // pred_check
      _
    $region26: #{sub_cost_volum_forward.9} parent=5 // pred_check_branch
      %144 = sbr.rel (%p141) target = $region28
    $region27: #{sub_cost_volum_forward.9} parent=5 // pred_region
      %s145 = ssub.s32 %s8, 1
      %p146 = scmp.lt.s32.totalorder %s17, 3
      %s147 = scalar_select %p146, %s17, 3
      %s148 = smul.addr %s147, 2
      %s149 = scalar_lea.vmem %s0, %s148
      %p150 = pneg %p46
      %p151 = pneg %p43
      %p152 = scmp.lt.s32.totalorder %s17, 3
      %s153 = scalar_select %p152, %s17, 3
      %p154 = scmp.lt.s32.totalorder %s18, 0
      %s155 = scalar_select %p154, %s18, 0
      %s156 = smul.addr %s153, 3
      %s157 = sadd.s32 %s155, %s156
      %s158 = smul.addr %s157, 4
      %s159 = scalar_lea.vmem %s1, %s158
      %p160 = pneg %p74
      %p161 = pneg %p71
      %p162 = pneg %p102
      %p163 = pneg %p99
      %p164 = scmp.lt.s32.totalorder %s17, 3
      %s165 = scalar_select %p164, %s17, 3
      %p166 = scmp.lt.s32.totalorder %s18, 0
      %s167 = scalar_select %p166, %s18, 0
      %s168 = sadd.s32 %s167, %s165
      %s169 = smul.addr %s168, 2
      %s170 = scalar_lea.vmem %s2, %s169
      %p171 = scmp.lt.s32.totalorder %s17, 3
      %s172 = scalar_select %p171, %s17, 3
      %s173 = smul.addr %s172, 2
      %s174 = scalar_lea.vmem %s0, %s173
      %p175 = scmp.lt.s32.totalorder %s17, 3
      %s176 = scalar_select %p175, %s17, 3
      %p177 = scmp.lt.s32.totalorder %s18, 0
      %s178 = scalar_select %p177, %s18, 0
      %s179 = smul.addr %s176, 3
      %s180 = sadd.s32 %s178, %s179
      %s181 = smul.addr %s180, 4
      %s182 = scalar_lea.vmem %s1, %s181
      %p183 = scmp.lt.s32.totalorder %s17, 3
      %s184 = scalar_select %p183, %s17, 3
      %p185 = scmp.lt.s32.totalorder %s18, 0
      %s186 = scalar_select %p185, %s18, 0
      %s187 = sadd.s32 %s186, %s184
      %s188 = smul.addr %s187, 2
      %s189 = scalar_lea.vmem %s2, %s188
      %v191 = vld [vmem:[%s174] sm:$0x3]
      %v192 = vld [vmem:[%s182] sm:$0xf]
      %v193 = vld [vmem:[%s182 + $0x4] sm:$0xf]
      %v194 = vld [vmem:[%s182 + $0x8] sm:$0x1]
      %v198 = vunpack.c.l.b16 %v192
      %v199 = vunpack.c.l.b16 %v193
      %v200 = vunpack.c.l.b16 %v194
      %v201 = vpack.c.b16 %v199, %v198
      %v202 = vpack.c.b16 %v200, %v200
      %vm204 = vcmask 146432
      %v206 = vsel %vm204, %v191, 0
      %vm208 = vcmask 1040384
      %v210 = vsel %vm208, %v202, 0
      %212 = vmatprep.subr.bf16.mxu0 0
      %213 = vmatpush1.bf16.msra.mxu0 0
      %214 = vmatprep.subr.bf16.mxu0 0
      %215 = vmatpush1.bf16.msra.mxu0 0
      %216 = vmatprep.subr.bf16.mxu0 0
      %217 = vmatpush1.bf16.msra.mxu0 0
      %218 = vmatprep.subr.bf16.mxu0 0
      %219 = vmatpush1.bf16.msra.mxu0 0
      %220 = vmatprep.subr.bf16.mxu0 0
      %221 = vmatpush1.bf16.msra.mxu0 0
      %222 = vmatprep.subr.bf16.mxu0 0
      %223 = vmatpush1.bf16.msra.mxu0 0
      %224 = vmatprep.subr.bf16.mxu0 0
      %225 = vmatpush1.bf16.msra.mxu0 %v210
      %226 = vmatprep.subr.bf16.mxu0 0
      %227 = vmatpush1.bf16.msra.mxu0 %v201
      %228 = vmatprep.subr.bf16.mxu0 0
      %229 = vmatpush2.bf16.msra.mxu0 0
      %230 = vmatprep.subr.bf16.mxu0 0
      %231 = vmatpush2.bf16.msra.mxu0 0
      %232 = vmatprep.subr.bf16.mxu0 0
      %233 = vmatpush2.bf16.msra.mxu0 0
      %234 = vmatprep.subr.bf16.mxu0 0
      %235 = vmatpush2.bf16.msra.mxu0 0
      %236 = vmatprep.subr.bf16.mxu0 0
      %237 = vmatpush2.bf16.msra.mxu0 0
      %238 = vmatprep.subr.bf16.mxu0 0
      %239 = vmatpush2.bf16.msra.mxu0 0
      %240 = vmatprep.subr.bf16.mxu0 0
      %241 = vmatpush2.bf16.msra.mxu0 0
      %242 = vmatprep.subr.bf16.mxu0 0
      %243 = vmatpush2.bf16.msra.mxu0 0
      %244 = vmatprep.mubr.bf16.mxu0 0
      %245 = vmatmul.mubr.bf16.gmra.mxu0 %v206
      %v246 = vpop.f32.mrf.mxu0
      %v247 = vadd.f32 0.0, %v246
      %v248 = vpop.f32.mrf.mxu0
      %v249 = vpop.f32.mrf.mxu0
      %v250 = vpop.f32.mrf.mxu0
      %251 = vdwg.mxu0
      %v252 = vpack.c.bf16 %v247, %v247
      %vm253 = vcmask 517120
      %254 = vst.msk [vmem:[%s189] sm:$0x3] %vm253, %v252
      %p255 = scmp.lt.s32.totalorder %s17, 3
      %s256 = scalar_select %p255, %s17, 3
      %p257 = scmp.lt.s32.totalorder %s18, 0
      %s258 = scalar_select %p257, %s18, 0
      %s259 = sadd.s32 %s258, %s256
      %s260 = smul.addr %s259, 2
      %s261 = scalar_lea.vmem %s2, %s260
      // Predicated region
      $region29: #{sub_cost_volum_forward.9} parent=27 // pred_check
        %p262 = pneg %p99
      $region30: #{sub_cost_volum_forward.9} parent=27 // pred_check_branch
        %264 = sbr.rel (%p262) target = $region32
      $region31: #{sub_cost_volum_forward.9} parent=27 // pred_region
        _
      $region32: #{sub_cost_volum_forward.9} parent=27 // pred_fallthru
        _
    $region28: #{sub_cost_volum_forward.9} parent=5 // pred_fallthru
      _
    %p265 = scmp.le.s32.totalorder 2, %s8
    // Predicated region
    $region33: #{sub_cost_volum_forward.9} parent=5 // pred_check
      %p266 = pneg %p265
    $region34: #{sub_cost_volum_forward.9} parent=5 // pred_check_branch
      %268 = sbr.rel (%p266) target = $region36
    $region35: #{sub_cost_volum_forward.9} parent=5 // pred_region
      %s269 = ssub.s32 %s8, 2
      // Predicated region
      $region37: #{sub_cost_volum_forward.9} parent=35 // pred_check
        %p270 = pneg %p105
      $region38: #{sub_cost_volum_forward.9} parent=35 // pred_check_branch
        %272 = sbr.rel (%p270) target = $region40
      $region39: #{sub_cost_volum_forward.9} parent=35 // pred_region
        %p273 = scmp.lt.s32.totalorder %s19, 3
        %s274 = scalar_select %p273, %s19, 3
        %p275 = scmp.lt.s32.totalorder %s20, 0
        %s276 = scalar_select %p275, %s20, 0
        %s277 = sadd.s32 %s276, %s274
        %s278 = smul.addr %s277, 2
        %s279 = scalar_lea.vmem %s2, %s278
      $region40: #{sub_cost_volum_forward.9} parent=35 // pred_fallthru
        _
    $region36: #{sub_cost_volum_forward.9} parent=5 // pred_fallthru
      _
  $region6: #{sub_cost_volum_forward.9} parent=0 // loop_footer
    %s12 = sadd.s32 1, %s8
  $region7: #{sub_cost_volum_forward.9} parent=0 // loop_footer_branch
    %7 = sbr.rel target = $region3
  $region8: #{sub_cost_volum_forward.9} parent=0 // loop_exit
    _

// kernel: sub_cost_volum_forward.8
$region0: #{sub_cost_volum_forward.8}
  #allocation0 [shape = 'u32[]', space=smem, size = 0x4, offset = 0x4, fixed_abs, tag = 'smem constant byte address 0x4 - core index']
  #allocation1 [shape = 'u32[144,128]{1,0:T(1,128)}', space=vmem, size = 0x12000, scoped, tag = 'internal scratch']
  %s0 = inlined_call_operand.vmem [shape: bf16[4,4,50], index: 0, kind: input, shape index: {}]
  %s1 = inlined_call_operand.vmem [shape: bf16[4,50,96], index: 1, kind: input, shape index: {}]
  %s2 = inlined_call_operand.vmem [shape: bf16[4,4,96], index: 2, kind: output, shape index: {}]
  %s3 = sld [smem:[#allocation0]]
  $region41: #{sub_cost_volum_forward.8} parent=0
    _
  %s5 = ssub.s32 1, %s3
  %s6 = scalar_select 0, %s5, %s3
  loop: start=0, step=1, limit=6
  $region2: #{sub_cost_volum_forward.8} parent=0 // loop_pre_header
    _
  $region3: #{sub_cost_volum_forward.8} parent=0 // loop_header
    %s8 = sphi 0, %s12
    %p9 = scmp.ge.s32.totalorder %s8, 6
    %s15 = sphi 0, %s27
    %s16 = sphi 0, %s23
    %s17 = sphi 0, %s15
    %s18 = sphi 0, %s16
    %s19 = sphi 0, %s17
    %s20 = sphi 0, %s18
    %s30 = sphi 0, %s32
    %s33 = sphi 0, %s30
    %s34 = sphi 0, %s33
    %s50 = sphi 0, %s34
    %s58 = sphi 0, %s60
    %s61 = sphi 0, %s58
    %s62 = sphi 0, %s61
    %s78 = sphi 0, %s62
    %s86 = sphi 0, %s88
    %s89 = sphi 0, %s86
    %s90 = sphi 0, %s89
    %s106 = sphi 0, %s90
  $region4: #{sub_cost_volum_forward.8} parent=0 // loop_header_branch
    %11 = sbr.rel (%p9) target = $region8
  $region5: #{sub_cost_volum_forward.8} parent=0 // loop_body
    %s13 = ssub.s32 %s8, 1
    %s14 = ssub.s32 %s8, 2
    %s21 = sadd.s32 1, %s16
    %p22 = scmp.ge.s32.totalorder %s21, 1
    %s23 = scalar_select %p22, 0, %s21
    %s24 = sadd.s32 1, %s15
    %s25 = scalar_select %p22, %s24, %s15
    %p26 = scmp.ge.s32.totalorder %s25, 4
    %s27 = scalar_select %p26, 0, %s25
    %s28 = ssub.s32 %s15, %s27
    %p29 = scmp.eq.s32.totalorder %s28, 0
    %s31 = sadd.s32 %s30, 1
    %s32 = scalar_select %p29, %s30, %s31
    %p35 = pneg %p29
    %p36 = scmp.eq.s32.totalorder %s8, 3
    %p37 = por %p35, %p36
    %p38 = scmp.ne.s32.totalorder %s30, %s33
    %p39 = scmp.eq.s32.totalorder %s8, 0
    %p40 = por %p38, %p39
    %p41 = scmp.ne.s32.totalorder %s30, %s33
    %p42 = scmp.eq.s32.totalorder %s13, 3
    %p43 = por %p41, %p42
    %p44 = scmp.ne.s32.totalorder %s33, %s34
    %p45 = scmp.eq.s32.totalorder %s13, 0
    %p46 = por %p44, %p45
    %p47 = scmp.ne.s32.totalorder %s33, %s34
    %p48 = scmp.eq.s32.totalorder %s14, 3
    %p49 = por %p47, %p48
    %p51 = scmp.ne.s32.totalorder %s34, %s50
    %p52 = scmp.eq.s32.totalorder %s14, 0
    %p53 = por %p51, %p52
    %s54 = ssub.s32 %s15, %s27
    %s55 = ssub.s32 %s16, %s23
    %s56 = sor.u32 %s54, %s55
    %p57 = scmp.eq.s32.totalorder %s56, 0
    %s59 = sadd.s32 %s58, 1
    %s60 = scalar_select %p57, %s58, %s59
    %p63 = pneg %p57
    %p64 = scmp.eq.s32.totalorder %s8, 3
    %p65 = por %p63, %p64
    %p66 = scmp.ne.s32.totalorder %s58, %s61
    %p67 = scmp.eq.s32.totalorder %s8, 0
    %p68 = por %p66, %p67
    %p69 = scmp.ne.s32.totalorder %s58, %s61
    %p70 = scmp.eq.s32.totalorder %s13, 3
    %p71 = por %p69, %p70
    %p72 = scmp.ne.s32.totalorder %s61, %s62
    %p73 = scmp.eq.s32.totalorder %s13, 0
    %p74 = por %p72, %p73
    %p75 = scmp.ne.s32.totalorder %s61, %s62
    %p76 = scmp.eq.s32.totalorder %s14, 3
    %p77 = por %p75, %p76
    %p79 = scmp.ne.s32.totalorder %s62, %s78
    %p80 = scmp.eq.s32.totalorder %s14, 0
    %p81 = por %p79, %p80
    %s82 = ssub.s32 %s15, %s27
    %s83 = ssub.s32 %s16, %s23
    %s84 = sor.u32 %s82, %s83
    %p85 = scmp.eq.s32.totalorder %s84, 0
    %s87 = sadd.s32 %s86, 1
    %s88 = scalar_select %p85, %s86, %s87
    %p91 = pneg %p85
    %p92 = scmp.eq.s32.totalorder %s8, 3
    %p93 = por %p91, %p92
    %p94 = scmp.ne.s32.totalorder %s86, %s89
    %p95 = scmp.eq.s32.totalorder %s8, 0
    %p96 = por %p94, %p95
    %p97 = scmp.ne.s32.totalorder %s86, %s89
    %p98 = scmp.eq.s32.totalorder %s13, 3
    %p99 = por %p97, %p98
    %p100 = scmp.ne.s32.totalorder %s89, %s90
    %p101 = scmp.eq.s32.totalorder %s13, 0
    %p102 = por %p100, %p101
    %p103 = scmp.ne.s32.totalorder %s89, %s90
    %p104 = scmp.eq.s32.totalorder %s14, 3
    %p105 = por %p103, %p104
    %p107 = scmp.ne.s32.totalorder %s90, %s106
    %p108 = scmp.eq.s32.totalorder %s14, 0
    %p109 = por %p107, %p108
    %p110 = scmp.le.s32.totalorder 1, %s8
    %p111 = scmp.lt.s32.totalorder %s8, 5
    %p112 = pnand %p110, %p111
    %p113 = pneg %p112
    // Predicated region
    $region9: #{sub_cost_volum_forward.8} parent=5 // pred_check
      _
    $region10: #{sub_cost_volum_forward.8} parent=5 // pred_check_branch
      %115 = sbr.rel (%p112) target = $region12
    $region11: #{sub_cost_volum_forward.8} parent=5 // pred_region
      %s116 = ssub.s32 %s8, 1
    $region12: #{sub_cost_volum_forward.8} parent=5 // pred_fallthru
      _
    %p117 = scmp.lt.s32.totalorder %s8, 4
    // Predicated region
    $region13: #{sub_cost_volum_forward.8} parent=5 // pred_check
      %p118 = pneg %p117
    $region14: #{sub_cost_volum_forward.8} parent=5 // pred_check_branch
      %120 = sbr.rel (%p118) target = $region16
    $region15: #{sub_cost_volum_forward.8} parent=5 // pred_region
      // Predicated region
      $region17: #{sub_cost_volum_forward.8} parent=15 // pred_check
        %p121 = pneg %p40
      $region18: #{sub_cost_volum_forward.8} parent=15 // pred_check_branch
        %123 = sbr.rel (%p121) target = $region20
      $region19: #{sub_cost_volum_forward.8} parent=15 // pred_region
        %p124 = scmp.lt.s32.totalorder %s15, 3
        %s125 = scalar_select %p124, %s15, 3
        %s126 = smul.addr %s125, 2
        %s127 = scalar_lea.vmem %s0, %s126
      $region20: #{sub_cost_volum_forward.8} parent=15 // pred_fallthru
        _
      // Predicated region
      $region21: #{sub_cost_volum_forward.8} parent=15 // pred_check
        %p128 = pneg %p68
      $region22: #{sub_cost_volum_forward.8} parent=15 // pred_check_branch
        %130 = sbr.rel (%p128) target = $region24
      $region23: #{sub_cost_volum_forward.8} parent=15 // pred_region
        %p131 = scmp.lt.s32.totalorder %s15, 3
        %s132 = scalar_select %p131, %s15, 3
        %p133 = scmp.lt.s32.totalorder %s16, 0
        %s134 = scalar_select %p133, %s16, 0
        %s135 = smul.addr %s132, 7
        %s136 = sadd.s32 %s134, %s135
        %s137 = smul.addr %s136, 4
        %s138 = scalar_lea.vmem %s1, %s137
      $region24: #{sub_cost_volum_forward.8} parent=15 // pred_fallthru
        _
    $region16: #{sub_cost_volum_forward.8} parent=5 // pred_fallthru
      _
    %p139 = scmp.le.s32.totalorder 1, %s8
    %p140 = scmp.lt.s32.totalorder %s8, 5
    %p141 = pnand %p139, %p140
    %p142 = pneg %p141
    // Predicated region
    $region25: #{sub_cost_volum_forward.8} parent=5 // pred_check
      _
    $region26: #{sub_cost_volum_forward.8} parent=5 // pred_check_branch
      %144 = sbr.rel (%p141) target = $region28
    $region27: #{sub_cost_volum_forward.8} parent=5 // pred_region
      %s145 = ssub.s32 %s8, 1
      %p146 = scmp.lt.s32.totalorder %s17, 3
      %s147 = scalar_select %p146, %s17, 3
      %s148 = smul.addr %s147, 2
      %s149 = scalar_lea.vmem %s0, %s148
      %p150 = pneg %p46
      %p151 = pneg %p43
      %p152 = scmp.lt.s32.totalorder %s17, 3
      %s153 = scalar_select %p152, %s17, 3
      %p154 = scmp.lt.s32.totalorder %s18, 0
      %s155 = scalar_select %p154, %s18, 0
      %s156 = smul.addr %s153, 7
      %s157 = sadd.s32 %s155, %s156
      %s158 = smul.addr %s157, 4
      %s159 = scalar_lea.vmem %s1, %s158
      %p160 = pneg %p74
      %p161 = pneg %p71
      %p162 = pneg %p102
      %p163 = pneg %p99
      %p164 = scmp.lt.s32.totalorder %s17, 3
      %s165 = scalar_select %p164, %s17, 3
      %p166 = scmp.lt.s32.totalorder %s18, 0
      %s167 = scalar_select %p166, %s18, 0
      %s168 = sadd.s32 %s167, %s165
      %s169 = smul.addr %s168, 2
      %s170 = scalar_lea.vmem %s2, %s169
      %p171 = scmp.lt.s32.totalorder %s17, 3
      %s172 = scalar_select %p171, %s17, 3
      %s173 = smul.addr %s172, 2
      %s174 = scalar_lea.vmem %s0, %s173
      %p175 = scmp.lt.s32.totalorder %s17, 3
      %s176 = scalar_select %p175, %s17, 3
      %p177 = scmp.lt.s32.totalorder %s18, 0
      %s178 = scalar_select %p177, %s18, 0
      %s179 = smul.addr %s176, 7
      %s180 = sadd.s32 %s178, %s179
      %s181 = smul.addr %s180, 4
      %s182 = scalar_lea.vmem %s1, %s181
      %p183 = scmp.lt.s32.totalorder %s17, 3
      %s184 = scalar_select %p183, %s17, 3
      %p185 = scmp.lt.s32.totalorder %s18, 0
      %s186 = scalar_select %p185, %s18, 0
      %s187 = sadd.s32 %s186, %s184
      %s188 = smul.addr %s187, 2
      %s189 = scalar_lea.vmem %s2, %s188
      %v191 = vld [vmem:[%s174] sm:$0x3]
      %v192 = vld [vmem:[%s182] sm:$0xf]
      %v193 = vld [vmem:[%s182 + $0x4] sm:$0xf]
      %v194 = vld [vmem:[%s182 + $0x8] sm:$0xf]
      %v195 = vld [vmem:[%s182 + $0xc] sm:$0xf]
      %v196 = vld [vmem:[%s182 + $0x10] sm:$0xf]
      %v197 = vld [vmem:[%s182 + $0x14] sm:$0xf]
      %v198 = vld [vmem:[%s182 + $0x18] sm:$0x1]
      %v206 = vunpack.c.l.b16 %v192
      %v207 = vunpack.c.l.b16 %v193
      %v208 = vunpack.c.l.b16 %v194
      %v209 = vunpack.c.l.b16 %v195
      %v210 = vunpack.c.l.b16 %v196
      %v211 = vunpack.c.l.b16 %v197
      %v212 = vunpack.c.l.b16 %v198
      %v213 = vpack.c.b16 %v207, %v206
      %v214 = vpack.c.b16 %v209, %v208
      %v215 = vpack.c.b16 %v211, %v210
      %v216 = vpack.c.b16 %v212, %v212
      %vm220 = vcmask 408576
      %v222 = vsel %vm220, %v191, 0
      %vm224 = vcmask 1040384
      %v226 = vsel %vm224, %v216, 0
      %228 = vmatprep.subr.bf16.mxu0 0
      %229 = vmatpush1.bf16.msra.mxu0 0
      %230 = vmatprep.subr.bf16.mxu0 0
      %231 = vmatpush1.bf16.msra.mxu0 0
      %232 = vmatprep.subr.bf16.mxu0 0
      %233 = vmatpush1.bf16.msra.mxu0 0
      %234 = vmatprep.subr.bf16.mxu0 0
      %235 = vmatpush1.bf16.msra.mxu0 0
      %236 = vmatprep.subr.bf16.mxu0 0
      %237 = vmatpush1.bf16.msra.mxu0 %v226
      %238 = vmatprep.subr.bf16.mxu0 0
      %239 = vmatpush1.bf16.msra.mxu0 %v215
      %240 = vmatprep.subr.bf16.mxu0 0
      %241 = vmatpush1.bf16.msra.mxu0 %v214
      %242 = vmatprep.subr.bf16.mxu0 0
      %243 = vmatpush1.bf16.msra.mxu0 %v213
      %244 = vmatprep.subr.bf16.mxu0 0
      %245 = vmatpush2.bf16.msra.mxu0 0
      %246 = vmatprep.subr.bf16.mxu0 0
      %247 = vmatpush2.bf16.msra.mxu0 0
      %248 = vmatprep.subr.bf16.mxu0 0
      %249 = vmatpush2.bf16.msra.mxu0 0
      %250 = vmatprep.subr.bf16.mxu0 0
      %251 = vmatpush2.bf16.msra.mxu0 0
      %252 = vmatprep.subr.bf16.mxu0 0
      %253 = vmatpush2.bf16.msra.mxu0 0
      %254 = vmatprep.subr.bf16.mxu0 0
      %255 = vmatpush2.bf16.msra.mxu0 0
      %256 = vmatprep.subr.bf16.mxu0 0
      %257 = vmatpush2.bf16.msra.mxu0 0
      %258 = vmatprep.subr.bf16.mxu0 0
      %259 = vmatpush2.bf16.msra.mxu0 0
      %260 = vmatprep.mubr.bf16.mxu0 0
      %261 = vmatmul.mubr.bf16.gmra.mxu0 %v222
      %v262 = vpop.f32.mrf.mxu0
      %v263 = vadd.f32 0.0, %v262
      %v264 = vpop.f32.mrf.mxu0
      %v265 = vpop.f32.mrf.mxu0
      %v266 = vpop.f32.mrf.mxu0
      %267 = vdwg.mxu0
      %v268 = vpack.c.bf16 %v263, %v263
      %vm269 = vcmask 779264
      %270 = vst.msk [vmem:[%s189] sm:$0x3] %vm269, %v268
      %p271 = scmp.lt.s32.totalorder %s17, 3
      %s272 = scalar_select %p271, %s17, 3
      %p273 = scmp.lt.s32.totalorder %s18, 0
      %s274 = scalar_select %p273, %s18, 0
      %s275 = sadd.s32 %s274, %s272
      %s276 = smul.addr %s275, 2
      %s277 = scalar_lea.vmem %s2, %s276
      // Predicated region
      $region29: #{sub_cost_volum_forward.8} parent=27 // pred_check
        %p278 = pneg %p99
      $region30: #{sub_cost_volum_forward.8} parent=27 // pred_check_branch
        %280 = sbr.rel (%p278) target = $region32
      $region31: #{sub_cost_volum_forward.8} parent=27 // pred_region
        _
      $region32: #{sub_cost_volum_forward.8} parent=27 // pred_fallthru
        _
    $region28: #{sub_cost_volum_forward.8} parent=5 // pred_fallthru
      _
    %p281 = scmp.le.s32.totalorder 2, %s8
    // Predicated region
    $region33: #{sub_cost_volum_forward.8} parent=5 // pred_check
      %p282 = pneg %p281
    $region34: #{sub_cost_volum_forward.8} parent=5 // pred_check_branch
      %284 = sbr.rel (%p282) target = $region36
    $region35: #{sub_cost_volum_forward.8} parent=5 // pred_region
      %s285 = ssub.s32 %s8, 2
      // Predicated region
      $region37: #{sub_cost_volum_forward.8} parent=35 // pred_check
        %p286 = pneg %p105
      $region38: #{sub_cost_volum_forward.8} parent=35 // pred_check_branch
        %288 = sbr.rel (%p286) target = $region40
      $region39: #{sub_cost_volum_forward.8} parent=35 // pred_region
        %p289 = scmp.lt.s32.totalorder %s19, 3
        %s290 = scalar_select %p289, %s19, 3
        %p291 = scmp.lt.s32.totalorder %s20, 0
        %s292 = scalar_select %p291, %s20, 0
        %s293 = sadd.s32 %s292, %s290
        %s294 = smul.addr %s293, 2
        %s295 = scalar_lea.vmem %s2, %s294
      $region40: #{sub_cost_volum_forward.8} parent=35 // pred_fallthru
        _
    $region36: #{sub_cost_volum_forward.8} parent=5 // pred_fallthru
      _
  $region6: #{sub_cost_volum_forward.8} parent=0 // loop_footer
    %s12 = sadd.s32 1, %s8
  $region7: #{sub_cost_volum_forward.8} parent=0 // loop_footer_branch
    %7 = sbr.rel target = $region3
  $region8: #{sub_cost_volum_forward.8} parent=0 // loop_exit
    _

// kernel: sub_cost_volum_forward.15
$region0: #{sub_cost_volum_forward.15}
  #allocation0 [shape = 'u32[]', space=smem, size = 0x4, offset = 0x4, fixed_abs, tag = 'smem constant byte address 0x4 - core index']
  #allocation1 [shape = 'u32[144,128]{1,0:T(1,128)}', space=vmem, size = 0x12000, scoped, tag = 'internal scratch']
  %s0 = inlined_call_operand.vmem [shape: bf16[1,8,16], index: 0, kind: input, shape index: {}]
  %s1 = inlined_call_operand.vmem [shape: bf16[14,16,16], index: 1, kind: input, shape index: {}]
  %s2 = inlined_call_operand.vmem [shape: f32[14,8,16], index: 2, kind: output, shape index: {}]
  %s3 = sld [smem:[#allocation0]]
  $region41: #{sub_cost_volum_forward.15} parent=0
    _
  %s5 = ssub.s32 1, %s3
  %s6 = scalar_select 0, %s5, %s3
  loop: start=0, step=1, limit=16
  $region2: #{sub_cost_volum_forward.15} parent=0 // loop_pre_header
    _
  $region3: #{sub_cost_volum_forward.15} parent=0 // loop_header
    %s8 = sphi 0, %s12
    %p9 = scmp.ge.s32.totalorder %s8, 16
    %s15 = sphi 0, %s27
    %s16 = sphi 0, %s23
    %s17 = sphi 0, %s15
    %s18 = sphi 0, %s16
    %s19 = sphi 0, %s17
    %s20 = sphi 0, %s18
    %s28 = sphi 0, %s28
    %s30 = sphi 0, %s28
    %s31 = sphi 0, %s30
    %s45 = sphi 0, %s31
    %s53 = sphi 0, %s55
    %s56 = sphi 0, %s53
    %s57 = sphi 0, %s56
    %s73 = sphi 0, %s57
    %s81 = sphi 0, %s83
    %s84 = sphi 0, %s81
    %s85 = sphi 0, %s84
    %s101 = sphi 0, %s85
  $region4: #{sub_cost_volum_forward.15} parent=0 // loop_header_branch
    %11 = sbr.rel (%p9) target = $region8
  $region5: #{sub_cost_volum_forward.15} parent=0 // loop_body
    %s13 = ssub.s32 %s8, 1
    %s14 = ssub.s32 %s8, 2
    %s21 = sadd.s32 1, %s16
    %p22 = scmp.ge.s32.totalorder %s21, 1
    %s23 = scalar_select %p22, 0, %s21
    %s24 = sadd.s32 1, %s15
    %s25 = scalar_select %p22, %s24, %s15
    %p26 = scmp.ge.s32.totalorder %s25, 14
    %s27 = scalar_select %p26, 0, %s25
    %s29 = sadd.s32 %s28, 1
    %p32 = scmp.eq.s32.totalorder %s8, 13
    %p33 = scmp.ne.s32.totalorder %s28, %s30
    %p34 = scmp.eq.s32.totalorder %s8, 0
    %p35 = por %p33, %p34
    %p36 = scmp.ne.s32.totalorder %s28, %s30
    %p37 = scmp.eq.s32.totalorder %s13, 13
    %p38 = por %p36, %p37
    %p39 = scmp.ne.s32.totalorder %s30, %s31
    %p40 = scmp.eq.s32.totalorder %s13, 0
    %p41 = por %p39, %p40
    %p42 = scmp.ne.s32.totalorder %s30, %s31
    %p43 = scmp.eq.s32.totalorder %s14, 13
    %p44 = por %p42, %p43
    %p46 = scmp.ne.s32.totalorder %s31, %s45
    %p47 = scmp.eq.s32.totalorder %s14, 0
    %p48 = por %p46, %p47
    %s49 = ssub.s32 %s15, %s27
    %s50 = ssub.s32 %s16, %s23
    %s51 = sor.u32 %s49, %s50
    %p52 = scmp.eq.s32.totalorder %s51, 0
    %s54 = sadd.s32 %s53, 1
    %s55 = scalar_select %p52, %s53, %s54
    %p58 = pneg %p52
    %p59 = scmp.eq.s32.totalorder %s8, 13
    %p60 = por %p58, %p59
    %p61 = scmp.ne.s32.totalorder %s53, %s56
    %p62 = scmp.eq.s32.totalorder %s8, 0
    %p63 = por %p61, %p62
    %p64 = scmp.ne.s32.totalorder %s53, %s56
    %p65 = scmp.eq.s32.totalorder %s13, 13
    %p66 = por %p64, %p65
    %p67 = scmp.ne.s32.totalorder %s56, %s57
    %p68 = scmp.eq.s32.totalorder %s13, 0
    %p69 = por %p67, %p68
    %p70 = scmp.ne.s32.totalorder %s56, %s57
    %p71 = scmp.eq.s32.totalorder %s14, 13
    %p72 = por %p70, %p71
    %p74 = scmp.ne.s32.totalorder %s57, %s73
    %p75 = scmp.eq.s32.totalorder %s14, 0
    %p76 = por %p74, %p75
    %s77 = ssub.s32 %s15, %s27
    %s78 = ssub.s32 %s16, %s23
    %s79 = sor.u32 %s77, %s78
    %p80 = scmp.eq.s32.totalorder %s79, 0
    %s82 = sadd.s32 %s81, 1
    %s83 = scalar_select %p80, %s81, %s82
    %p86 = pneg %p80
    %p87 = scmp.eq.s32.totalorder %s8, 13
    %p88 = por %p86, %p87
    %p89 = scmp.ne.s32.totalorder %s81, %s84
    %p90 = scmp.eq.s32.totalorder %s8, 0
    %p91 = por %p89, %p90
    %p92 = scmp.ne.s32.totalorder %s81, %s84
    %p93 = scmp.eq.s32.totalorder %s13, 13
    %p94 = por %p92, %p93
    %p95 = scmp.ne.s32.totalorder %s84, %s85
    %p96 = scmp.eq.s32.totalorder %s13, 0
    %p97 = por %p95, %p96
    %p98 = scmp.ne.s32.totalorder %s84, %s85
    %p99 = scmp.eq.s32.totalorder %s14, 13
    %p100 = por %p98, %p99
    %p102 = scmp.ne.s32.totalorder %s85, %s101
    %p103 = scmp.eq.s32.totalorder %s14, 0
    %p104 = por %p102, %p103
    %p105 = scmp.le.s32.totalorder 1, %s8
    %p106 = scmp.lt.s32.totalorder %s8, 15
    %p107 = pnand %p105, %p106
    %p108 = pneg %p107
    // Predicated region
    $region9: #{sub_cost_volum_forward.15} parent=5 // pred_check
      _
    $region10: #{sub_cost_volum_forward.15} parent=5 // pred_check_branch
      %110 = sbr.rel (%p107) target = $region12
    $region11: #{sub_cost_volum_forward.15} parent=5 // pred_region
      %s111 = ssub.s32 %s8, 1
      // Predicated region
      $region13: #{sub_cost_volum_forward.15} parent=11 // pred_check
        %p112 = pneg %p41
      $region14: #{sub_cost_volum_forward.15} parent=11 // pred_check_branch
        %114 = sbr.rel (%p112) target = $region16
      $region15: #{sub_cost_volum_forward.15} parent=11 // pred_region
        _
      $region16: #{sub_cost_volum_forward.15} parent=11 // pred_fallthru
        _
    $region12: #{sub_cost_volum_forward.15} parent=5 // pred_fallthru
      _
    %p115 = scmp.lt.s32.totalorder %s8, 14
    // Predicated region
    $region17: #{sub_cost_volum_forward.15} parent=5 // pred_check
      %p116 = pneg %p115
    $region18: #{sub_cost_volum_forward.15} parent=5 // pred_check_branch
      %118 = sbr.rel (%p116) target = $region20
    $region19: #{sub_cost_volum_forward.15} parent=5 // pred_region
      // Predicated region
      $region21: #{sub_cost_volum_forward.15} parent=19 // pred_check
        %p119 = pneg %p63
      $region22: #{sub_cost_volum_forward.15} parent=19 // pred_check_branch
        %121 = sbr.rel (%p119) target = $region24
      $region23: #{sub_cost_volum_forward.15} parent=19 // pred_region
        %p122 = scmp.lt.s32.totalorder %s15, 13
        %s123 = scalar_select %p122, %s15, 13
        %p124 = scmp.lt.s32.totalorder %s16, 0
        %s125 = scalar_select %p124, %s16, 0
        %s126 = smul.addr %s123, 2
        %s127 = sadd.s32 %s125, %s126
        %s128 = smul.addr %s127, 4
        %s129 = scalar_lea.vmem %s1, %s128
      $region24: #{sub_cost_volum_forward.15} parent=19 // pred_fallthru
        _
    $region20: #{sub_cost_volum_forward.15} parent=5 // pred_fallthru
      _
    %p130 = scmp.le.s32.totalorder 1, %s8
    %p131 = scmp.lt.s32.totalorder %s8, 15
    %p132 = pnand %p130, %p131
    %p133 = pneg %p132
    // Predicated region
    $region25: #{sub_cost_volum_forward.15} parent=5 // pred_check
      _
    $region26: #{sub_cost_volum_forward.15} parent=5 // pred_check_branch
      %135 = sbr.rel (%p132) target = $region28
    $region27: #{sub_cost_volum_forward.15} parent=5 // pred_region
      %s136 = ssub.s32 %s8, 1
      %p137 = pneg %p41
      %p138 = pneg %p38
      %p139 = scmp.lt.s32.totalorder %s17, 13
      %s140 = scalar_select %p139, %s17, 13
      %p141 = scmp.lt.s32.totalorder %s18, 0
      %s142 = scalar_select %p141, %s18, 0
      %s143 = smul.addr %s140, 2
      %s144 = sadd.s32 %s142, %s143
      %s145 = smul.addr %s144, 4
      %s146 = scalar_lea.vmem %s1, %s145
      %p147 = pneg %p69
      %p148 = pneg %p66
      %p149 = pneg %p97
      %p150 = pneg %p94
      %p151 = scmp.lt.s32.totalorder %s17, 13
      %s152 = scalar_select %p151, %s17, 13
      %p153 = scmp.lt.s32.totalorder %s18, 0
      %s154 = scalar_select %p153, %s18, 0
      %s155 = sadd.s32 %s154, %s152
      %s156 = smul.addr %s155, 8
      %s157 = scalar_lea.vmem %s2, %s156
      %p158 = scmp.lt.s32.totalorder %s17, 13
      %s159 = scalar_select %p158, %s17, 13
      %p160 = scmp.lt.s32.totalorder %s18, 0
      %s161 = scalar_select %p160, %s18, 0
      %s162 = smul.addr %s159, 2
      %s163 = sadd.s32 %s161, %s162
      %s164 = smul.addr %s163, 4
      %s165 = scalar_lea.vmem %s1, %s164
      %p166 = scmp.lt.s32.totalorder %s17, 13
      %s167 = scalar_select %p166, %s17, 13
      %p168 = scmp.lt.s32.totalorder %s18, 0
      %s169 = scalar_select %p168, %s18, 0
      %s170 = sadd.s32 %s169, %s167
      %s171 = smul.addr %s170, 8
      %s172 = scalar_lea.vmem %s2, %s171
      %v174 = vld [vmem:[%s0] sm:$0xf]
      %v175 = vld [vmem:[%s165] sm:$0xf]
      %v176 = vld [vmem:[%s165 + $0x4] sm:$0xf]
      %v179 = vunpack.c.l.b16 %v175
      %v180 = vunpack.c.l.b16 %v176
      %v181 = vpack.c.b16 %v180, %v179
      %vm183 = vcmask 130048
      %v185 = vsel %vm183, %v174, 0
      %187 = vmatprep.subr.bf16.mxu0 0
      %188 = vmatpush1.bf16.msra.mxu0 0
      %189 = vmatprep.subr.bf16.mxu0 0
      %190 = vmatpush1.bf16.msra.mxu0 0
      %191 = vmatprep.subr.bf16.mxu0 0
      %192 = vmatpush1.bf16.msra.mxu0 0
      %193 = vmatprep.subr.bf16.mxu0 0
      %194 = vmatpush1.bf16.msra.mxu0 0
      %195 = vmatprep.subr.bf16.mxu0 0
      %196 = vmatpush1.bf16.msra.mxu0 0
      %197 = vmatprep.subr.bf16.mxu0 0
      %198 = vmatpush1.bf16.msra.mxu0 0
      %199 = vmatprep.subr.bf16.mxu0 0
      %200 = vmatpush1.bf16.msra.mxu0 0
      %201 = vmatprep.subr.bf16.mxu0 0
      %202 = vmatpush1.bf16.msra.mxu0 %v181
      %203 = vmatprep.subr.bf16.mxu0 0
      %204 = vmatpush2.bf16.msra.mxu0 0
      %205 = vmatprep.subr.bf16.mxu0 0
      %206 = vmatpush2.bf16.msra.mxu0 0
      %207 = vmatprep.subr.bf16.mxu0 0
      %208 = vmatpush2.bf16.msra.mxu0 0
      %209 = vmatprep.subr.bf16.mxu0 0
      %210 = vmatpush2.bf16.msra.mxu0 0
      %211 = vmatprep.subr.bf16.mxu0 0
      %212 = vmatpush2.bf16.msra.mxu0 0
      %213 = vmatprep.subr.bf16.mxu0 0
      %214 = vmatpush2.bf16.msra.mxu0 0
      %215 = vmatprep.subr.bf16.mxu0 0
      %216 = vmatpush2.bf16.msra.mxu0 0
      %217 = vmatprep.subr.bf16.mxu0 0
      %218 = vmatpush2.bf16.msra.mxu0 0
      %219 = vmatprep.mubr.bf16.mxu0 0
      %220 = vmatmul.mubr.bf16.gmra.mxu0 %v185
      %v221 = vpop.f32.mrf.mxu0
      %v222 = vadd.f32 0.0, %v221
      %v223 = vpop.f32.mrf.mxu0
      %v224 = vpop.f32.mrf.mxu0
      %v225 = vpop.f32.mrf.mxu0
      %226 = vdwg.mxu0
      %227 = vst.msk [vmem:[%s172] sm:$0xff] %vm183, %v222
      %p228 = scmp.lt.s32.totalorder %s17, 13
      %s229 = scalar_select %p228, %s17, 13
      %p230 = scmp.lt.s32.totalorder %s18, 0
      %s231 = scalar_select %p230, %s18, 0
      %s232 = sadd.s32 %s231, %s229
      %s233 = smul.addr %s232, 8
      %s234 = scalar_lea.vmem %s2, %s233
      // Predicated region
      $region29: #{sub_cost_volum_forward.15} parent=27 // pred_check
        %p235 = pneg %p94
      $region30: #{sub_cost_volum_forward.15} parent=27 // pred_check_branch
        %237 = sbr.rel (%p235) target = $region32
      $region31: #{sub_cost_volum_forward.15} parent=27 // pred_region
        _
      $region32: #{sub_cost_volum_forward.15} parent=27 // pred_fallthru
        _
    $region28: #{sub_cost_volum_forward.15} parent=5 // pred_fallthru
      _
    %p238 = scmp.le.s32.totalorder 2, %s8
    // Predicated region
    $region33: #{sub_cost_volum_forward.15} parent=5 // pred_check
      %p239 = pneg %p238
    $region34: #{sub_cost_volum_forward.15} parent=5 // pred_check_branch
      %241 = sbr.rel (%p239) target = $region36
    $region35: #{sub_cost_volum_forward.15} parent=5 // pred_region
      %s242 = ssub.s32 %s8, 2
      // Predicated region
      $region37: #{sub_cost_volum_forward.15} parent=35 // pred_check
        %p243 = pneg %p100
      $region38: #{sub_cost_volum_forward.15} parent=35 // pred_check_branch
        %245 = sbr.rel (%p243) target = $region40
      $region39: #{sub_cost_volum_forward.15} parent=35 // pred_region
        %p246 = scmp.lt.s32.totalorder %s19, 13
        %s247 = scalar_select %p246, %s19, 13
        %p248 = scmp.lt.s32.totalorder %s20, 0
        %s249 = scalar_select %p248, %s20, 0
        %s250 = sadd.s32 %s249, %s247
        %s251 = smul.addr %s250, 8
        %s252 = scalar_lea.vmem %s2, %s251
      $region40: #{sub_cost_volum_forward.15} parent=35 // pred_fallthru
        _
    $region36: #{sub_cost_volum_forward.15} parent=5 // pred_fallthru
      _
  $region6: #{sub_cost_volum_forward.15} parent=0 // loop_footer
    %s12 = sadd.s32 1, %s8
  $region7: #{sub_cost_volum_forward.15} parent=0 // loop_footer_branch
    %7 = sbr.rel target = $region3
  $region8: #{sub_cost_volum_forward.15} parent=0 // loop_exit
    _

// kernel: sub_cost_volum_forward.14
$region0: #{sub_cost_volum_forward.14}
  #allocation0 [shape = 'u32[]', space=smem, size = 0x4, offset = 0x4, fixed_abs, tag = 'smem constant byte address 0x4 - core index']
  #allocation1 [shape = 'u32[144,128]{1,0:T(1,128)}', space=vmem, size = 0x12000, scoped, tag = 'internal scratch']
  %s0 = inlined_call_operand.vmem [shape: bf16[192,16], index: 0, kind: input, shape index: {}]
  %s1 = inlined_call_operand.vmem [shape: bf16[16,224], index: 1, kind: input, shape index: {}]
  %s2 = inlined_call_operand.vmem [shape: bf16[16,224], index: 2, kind: output, shape index: {}]
  %s3 = sld [smem:[#allocation0]]
  $region18: #{sub_cost_volum_forward.14} parent=0
    _
  %s5 = ssub.s32 1, %s3
  %s6 = scalar_select 0, %s5, %s3
  // Predicated region
  $region2: #{sub_cost_volum_forward.14} parent=0 // pred_check
    _
  $region3: #{sub_cost_volum_forward.14} parent=0 // pred_check_branch
    %8 = sbr.rel (0) target = $region5
  $region4: #{sub_cost_volum_forward.14} parent=0 // pred_region
    _
  $region5: #{sub_cost_volum_forward.14} parent=0 // pred_fallthru
    _
  // Predicated region
  $region6: #{sub_cost_volum_forward.14} parent=0 // pred_check
    _
  $region7: #{sub_cost_volum_forward.14} parent=0 // pred_check_branch
    %10 = sbr.rel (0) target = $region9
  $region8: #{sub_cost_volum_forward.14} parent=0 // pred_region
    _
  $region9: #{sub_cost_volum_forward.14} parent=0 // pred_fallthru
    _
  %v12 = vld [vmem:[%s1] sm:$0xff]
  %v13 = vld [vmem:[%s1 + $0x8] sm:$0xff]
  %v14 = vld [vmem:[%s0] sm:$0xf]
  %v15 = vld [vmem:[%s0 + $0x4] sm:$0xf]
  %v16 = vld [vmem:[%s0 + $0x8] sm:$0xf]
  %v17 = vld [vmem:[%s0 + $0xc] sm:$0xf]
  %v18 = vld [vmem:[%s0 + $0x10] sm:$0xf]
  %v19 = vld [vmem:[%s0 + $0x14] sm:$0xf]
  %v20 = vld [vmem:[%s0 + $0x18] sm:$0xf]
  %v21 = vld [vmem:[%s0 + $0x1c] sm:$0xf]
  %v22 = vld [vmem:[%s0 + $0x20] sm:$0xf]
  %v23 = vld [vmem:[%s0 + $0x24] sm:$0xf]
  %v24 = vld [vmem:[%s0 + $0x28] sm:$0xf]
  %v25 = vld [vmem:[%s0 + $0x2c] sm:$0xf]
  %v26 = vld [vmem:[%s0 + $0x30] sm:$0xf]
  %v27 = vld [vmem:[%s0 + $0x34] sm:$0xf]
  %v28 = vld [vmem:[%s0 + $0x38] sm:$0xf]
  %v29 = vld [vmem:[%s0 + $0x3c] sm:$0xf]
  %v30 = vld [vmem:[%s0 + $0x40] sm:$0xf]
  %v31 = vld [vmem:[%s0 + $0x44] sm:$0xf]
  %v32 = vld [vmem:[%s0 + $0x48] sm:$0xf]
  %v33 = vld [vmem:[%s0 + $0x4c] sm:$0xf]
  %v34 = vld [vmem:[%s0 + $0x50] sm:$0xf]
  %v35 = vld [vmem:[%s0 + $0x54] sm:$0xf]
  %v36 = vld [vmem:[%s0 + $0x58] sm:$0xf]
  %v37 = vld [vmem:[%s0 + $0x5c] sm:$0xf]
  %v62 = vunpack.c.l.b16 %v14
  %v63 = vunpack.c.l.b16 %v15
  %v64 = vunpack.c.l.b16 %v16
  %v65 = vunpack.c.l.b16 %v17
  %v66 = vunpack.c.l.b16 %v18
  %v67 = vunpack.c.l.b16 %v19
  %v68 = vunpack.c.l.b16 %v20
  %v69 = vunpack.c.l.b16 %v21
  %v70 = vunpack.c.l.b16 %v22
  %v71 = vunpack.c.l.b16 %v23
  %v72 = vunpack.c.l.b16 %v24
  %v73 = vunpack.c.l.b16 %v25
  %v74 = vunpack.c.l.b16 %v26
  %v75 = vunpack.c.l.b16 %v27
  %v76 = vunpack.c.l.b16 %v28
  %v77 = vunpack.c.l.b16 %v29
  %v78 = vunpack.c.l.b16 %v30
  %v79 = vunpack.c.l.b16 %v31
  %v80 = vunpack.c.l.b16 %v32
  %v81 = vunpack.c.l.b16 %v33
  %v82 = vunpack.c.l.b16 %v34
  %v83 = vunpack.c.l.b16 %v35
  %v84 = vunpack.c.l.b16 %v36
  %v85 = vunpack.c.l.b16 %v37
  %v86 = vpack.c.b16 %v63, %v62
  %v87 = vpack.c.b16 %v65, %v64
  %v88 = vpack.c.b16 %v67, %v66
  %v89 = vpack.c.b16 %v69, %v68
  %v90 = vpack.c.b16 %v71, %v70
  %v91 = vpack.c.b16 %v73, %v72
  %v92 = vpack.c.b16 %v75, %v74
  %v93 = vpack.c.b16 %v77, %v76
  %v94 = vpack.c.b16 %v79, %v78
  %v95 = vpack.c.b16 %v81, %v80
  %v96 = vpack.c.b16 %v83, %v82
  %v97 = vpack.c.b16 %v85, %v84
  %v100 = vunpack.c.l.b16 %v12
  %v101 = vunpack.c.h.b16 %v12
  %v102 = vunpack.c.l.b16 %v13
  %v103 = vunpack.c.h.b16 %v13
  %v104 = vpack.c.b16 %v102, %v100
  %v105 = vpack.c.b16 %v103, %v101
  %vm108 = vcmask 130048
  %v110 = vsel %vm108, %v86, 0
  %v113 = vsel %vm108, %v87, 0
  %v116 = vsel %vm108, %v88, 0
  %v119 = vsel %vm108, %v89, 0
  %v122 = vsel %vm108, %v90, 0
  %v125 = vsel %vm108, %v91, 0
  %v128 = vsel %vm108, %v92, 0
  %v131 = vsel %vm108, %v93, 0
  %v134 = vsel %vm108, %v94, 0
  %v137 = vsel %vm108, %v95, 0
  %v140 = vsel %vm108, %v96, 0
  %v143 = vsel %vm108, %v97, 0
  %145 = vmatprep.subr.bf16.mxu0 0
  %146 = vmatpush1.bf16.msra.mxu0 0
  %147 = vmatprep.subr.bf16.mxu0 0
  %148 = vmatpush1.bf16.msra.mxu0 0
  %149 = vmatprep.subr.bf16.mxu0 0
  %150 = vmatpush1.bf16.msra.mxu0 0
  %151 = vmatprep.subr.bf16.mxu0 0
  %152 = vmatpush1.bf16.msra.mxu0 0
  %153 = vmatprep.subr.bf16.mxu0 0
  %154 = vmatpush1.bf16.msra.mxu0 0
  %155 = vmatprep.subr.bf16.mxu0 0
  %156 = vmatpush1.bf16.msra.mxu0 0
  %157 = vmatprep.subr.bf16.mxu0 0
  %158 = vmatpush1.bf16.msra.mxu0 0
  %159 = vmatprep.subr.bf16.mxu0 %v105
  %160 = vmatpush1.bf16.msra.mxu0 %v104
  %161 = vmatprep.subr.bf16.mxu0 0
  %162 = vmatpush2.bf16.msra.mxu0 0
  %163 = vmatprep.subr.bf16.mxu0 0
  %164 = vmatpush2.bf16.msra.mxu0 0
  %165 = vmatprep.subr.bf16.mxu0 0
  %166 = vmatpush2.bf16.msra.mxu0 0
  %167 = vmatprep.subr.bf16.mxu0 0
  %168 = vmatpush2.bf16.msra.mxu0 0
  %169 = vmatprep.subr.bf16.mxu0 0
  %170 = vmatpush2.bf16.msra.mxu0 0
  %171 = vmatprep.subr.bf16.mxu0 0
  %172 = vmatpush2.bf16.msra.mxu0 0
  %173 = vmatprep.subr.bf16.mxu0 0
  %174 = vmatpush2.bf16.msra.mxu0 0
  %175 = vmatprep.subr.bf16.mxu0 0
  %176 = vmatpush2.bf16.msra.mxu0 0
  %177 = vmatprep.mubr.bf16.mxu0 0
  %178 = vmatmul.mubr.bf16.gmra.mxu0 %v110
  %v179 = vpop.f32.mrf.mxu0
  %v180 = vadd.f32 0.0, %v179
  %v181 = vpop.f32.mrf.mxu0
  %v182 = vadd.f32 0.0, %v181
  %v183 = vpop.f32.mrf.mxu0
  %v184 = vadd.f32 0.0, %v183
  %v185 = vpop.f32.mrf.mxu0
  %v186 = vadd.f32 0.0, %v185
  %187 = vmatprep.mubr.bf16.mxu0 0
  %188 = vmatmul.mubr.bf16.gmra.mxu0 %v113
  %v189 = vpop.f32.mrf.mxu0
  %v190 = vadd.f32 0.0, %v189
  %v191 = vpop.f32.mrf.mxu0
  %v192 = vadd.f32 0.0, %v191
  %v193 = vpop.f32.mrf.mxu0
  %v194 = vadd.f32 0.0, %v193
  %v195 = vpop.f32.mrf.mxu0
  %v196 = vadd.f32 0.0, %v195
  %197 = vmatprep.mubr.bf16.mxu0 0
  %198 = vmatmul.mubr.bf16.gmra.mxu0 %v116
  %v199 = vpop.f32.mrf.mxu0
  %v200 = vadd.f32 0.0, %v199
  %v201 = vpop.f32.mrf.mxu0
  %v202 = vadd.f32 0.0, %v201
  %v203 = vpop.f32.mrf.mxu0
  %v204 = vadd.f32 0.0, %v203
  %v205 = vpop.f32.mrf.mxu0
  %v206 = vadd.f32 0.0, %v205
  %207 = vmatprep.mubr.bf16.mxu0 0
  %208 = vmatmul.mubr.bf16.gmra.mxu0 %v119
  %v209 = vpop.f32.mrf.mxu0
  %v210 = vadd.f32 0.0, %v209
  %v211 = vpop.f32.mrf.mxu0
  %v212 = vadd.f32 0.0, %v211
  %v213 = vpop.f32.mrf.mxu0
  %v214 = vadd.f32 0.0, %v213
  %v215 = vpop.f32.mrf.mxu0
  %v216 = vadd.f32 0.0, %v215
  %217 = vmatprep.mubr.bf16.mxu0 0
  %218 = vmatmul.mubr.bf16.gmra.mxu0 %v122
  %v219 = vpop.f32.mrf.mxu0
  %v220 = vadd.f32 0.0, %v219
  %v221 = vpop.f32.mrf.mxu0
  %v222 = vadd.f32 0.0, %v221
  %v223 = vpop.f32.mrf.mxu0
  %v224 = vadd.f32 0.0, %v223
  %v225 = vpop.f32.mrf.mxu0
  %v226 = vadd.f32 0.0, %v225
  %227 = vmatprep.mubr.bf16.mxu0 0
  %228 = vmatmul.mubr.bf16.gmra.mxu0 %v125
  %v229 = vpop.f32.mrf.mxu0
  %v230 = vadd.f32 0.0, %v229
  %v231 = vpop.f32.mrf.mxu0
  %v232 = vadd.f32 0.0, %v231
  %v233 = vpop.f32.mrf.mxu0
  %v234 = vadd.f32 0.0, %v233
  %v235 = vpop.f32.mrf.mxu0
  %v236 = vadd.f32 0.0, %v235
  %237 = vmatprep.mubr.bf16.mxu0 0
  %238 = vmatmul.mubr.bf16.gmra.mxu0 %v128
  %v239 = vpop.f32.mrf.mxu0
  %v240 = vadd.f32 0.0, %v239
  %v241 = vpop.f32.mrf.mxu0
  %v242 = vadd.f32 0.0, %v241
  %v243 = vpop.f32.mrf.mxu0
  %v244 = vadd.f32 0.0, %v243
  %v245 = vpop.f32.mrf.mxu0
  %v246 = vadd.f32 0.0, %v245
  %247 = vmatprep.mubr.bf16.mxu0 0
  %248 = vmatmul.mubr.bf16.gmra.mxu0 %v131
  %v249 = vpop.f32.mrf.mxu0
  %v250 = vadd.f32 0.0, %v249
  %v251 = vpop.f32.mrf.mxu0
  %v252 = vadd.f32 0.0, %v251
  %v253 = vpop.f32.mrf.mxu0
  %v254 = vadd.f32 0.0, %v253
  %v255 = vpop.f32.mrf.mxu0
  %v256 = vadd.f32 0.0, %v255
  %257 = vmatprep.mubr.bf16.mxu0 0
  %258 = vmatmul.mubr.bf16.gmra.mxu0 %v134
  %v259 = vpop.f32.mrf.mxu0
  %v260 = vadd.f32 0.0, %v259
  %v261 = vpop.f32.mrf.mxu0
  %v262 = vadd.f32 0.0, %v261
  %v263 = vpop.f32.mrf.mxu0
  %v264 = vadd.f32 0.0, %v263
  %v265 = vpop.f32.mrf.mxu0
  %v266 = vadd.f32 0.0, %v265
  %267 = vmatprep.mubr.bf16.mxu0 0
  %268 = vmatmul.mubr.bf16.gmra.mxu0 %v137
  %v269 = vpop.f32.mrf.mxu0
  %v270 = vadd.f32 0.0, %v269
  %v271 = vpop.f32.mrf.mxu0
  %v272 = vadd.f32 0.0, %v271
  %v273 = vpop.f32.mrf.mxu0
  %v274 = vadd.f32 0.0, %v273
  %v275 = vpop.f32.mrf.mxu0
  %v276 = vadd.f32 0.0, %v275
  %277 = vmatprep.mubr.bf16.mxu0 0
  %278 = vmatmul.mubr.bf16.gmra.mxu0 %v140
  %v279 = vpop.f32.mrf.mxu0
  %v280 = vadd.f32 0.0, %v279
  %v281 = vpop.f32.mrf.mxu0
  %v282 = vadd.f32 0.0, %v281
  %v283 = vpop.f32.mrf.mxu0
  %v284 = vadd.f32 0.0, %v283
  %v285 = vpop.f32.mrf.mxu0
  %v286 = vadd.f32 0.0, %v285
  %287 = vmatprep.mubr.bf16.mxu0 0
  %288 = vmatmul.mubr.bf16.gmra.mxu0 %v143
  %v289 = vpop.f32.mrf.mxu0
  %v290 = vadd.f32 0.0, %v289
  %v291 = vpop.f32.mrf.mxu0
  %v292 = vadd.f32 0.0, %v291
  %v293 = vpop.f32.mrf.mxu0
  %v294 = vadd.f32 0.0, %v293
  %v295 = vpop.f32.mrf.mxu0
  %v296 = vadd.f32 0.0, %v295
  %297 = vdwg.mxu0
  %v298 = vunpack.c.l.bf16 %v12
  %v299 = vunpack.c.h.bf16 %v12
  %v300 = vunpack.c.l.bf16 %v13
  %v301 = vunpack.c.h.bf16 %v13
  %v302 = vmul.f32 %v180, %v220
  %v303 = vmul.f32 %v182, %v222
  %v304 = vmul.f32 %v184, %v224
  %v305 = vmul.f32 %v186, %v226
  %v306 = vmul.f32 %v302, 0.25
  %v307 = vmul.f32 %v303, 0.25
  %v308 = vmul.f32 %v304, 0.25
  %v309 = vmul.f32 %v305, 0.25
  %v310 = vmax.f32 %v306, %v308
  %v311 = vrot.slane %v310, 4
  %v312 = vmax.f32 %v310, %v311
  %v313 = vrot.slane %v312, 2
  %v314 = vmax.f32 %v312, %v313
  %v315 = vrot.slane %v314, 1
  %v316 = vmax.f32 %v314, %v315
  %vm317 = vcmask 785408
  %v318 = vsel %vm317, %v307, -inf
  %v319 = vsel %vm317, %v309, -inf
  %v320 = vmax.f32 %v318, %v319
  %v321 = vrot.slane %v320, 4
  %v322 = vmax.f32 %v320, %v321
  %v323 = vrot.slane %v322, 2
  %v324 = vmax.f32 %v322, %v323
  %v325 = vrot.slane %v324, 1
  %v326 = vmax.f32 %v324, %v325
  %v327 = vsub.f32 %v306, %v316
  %v328 = vsub.f32 %v307, %v326
  %v329 = vsub.f32 %v308, %v316
  %v330 = vsub.f32 %v309, %v326
  %v331 = vmul.f32 %v327, 1.442695
  %v332 = vpow.pop %v331
  %v333 = vmul.f32 %v328, 1.442695
  %v334 = vpow.pop %v333
  %v335 = vmul.f32 %v329, 1.442695
  %v336 = vpow.pop %v335
  %v337 = vmul.f32 %v330, 1.442695
  %v338 = vpow.pop %v337
  %v339 = vadd.f32 %v332, %v336
  %v340 = vrot.slane %v339, 4
  %v341 = vadd.f32 %v339, %v340
  %v342 = vrot.slane %v341, 2
  %v343 = vadd.f32 %v341, %v342
  %v344 = vrot.slane %v343, 1
  %v345 = vadd.f32 %v343, %v344
  %v346 = vsel %vm317, %v334, 0.0
  %v347 = vsel %vm317, %v338, 0.0
  %v348 = vadd.f32 %v346, %v347
  %v349 = vrot.slane %v348, 4
  %v350 = vadd.f32 %v348, %v349
  %v351 = vrot.slane %v350, 2
  %v352 = vadd.f32 %v350, %v351
  %v353 = vrot.slane %v352, 1
  %v354 = vadd.f32 %v352, %v353
  %v355 = vrcp.pop %v345
  %v356 = vrcp.pop %v354
  %v357 = vmul.f32 %v332, %v355
  %v358 = vmul.f32 %v334, %v356
  %v359 = vmul.f32 %v336, %v355
  %v360 = vmul.f32 %v338, %v356
  %v361 = vmul.f32 %v357, %v260
  %v362 = vmul.f32 %v358, %v262
  %v363 = vmul.f32 %v359, %v264
  %v364 = vmul.f32 %v360, %v266
  %v365 = vadd.f32 %v298, %v361
  %v366 = vadd.f32 %v299, %v362
  %v367 = vadd.f32 %v300, %v363
  %v368 = vadd.f32 %v301, %v364
  %v369 = vmul.f32 %v190, %v230
  %v370 = vmul.f32 %v192, %v232
  %v371 = vmul.f32 %v194, %v234
  %v372 = vmul.f32 %v196, %v236
  %v373 = vmul.f32 %v369, 0.25
  %v374 = vmul.f32 %v370, 0.25
  %v375 = vmul.f32 %v371, 0.25
  %v376 = vmul.f32 %v372, 0.25
  %v377 = vmax.f32 %v373, %v375
  %v378 = vrot.slane %v377, 4
  %v379 = vmax.f32 %v377, %v378
  %v380 = vrot.slane %v379, 2
  %v381 = vmax.f32 %v379, %v380
  %v382 = vrot.slane %v381, 1
  %v383 = vmax.f32 %v381, %v382
  %v384 = vsel %vm317, %v374, -inf
  %v385 = vsel %vm317, %v376, -inf
  %v386 = vmax.f32 %v384, %v385
  %v387 = vrot.slane %v386, 4
  %v388 = vmax.f32 %v386, %v387
  %v389 = vrot.slane %v388, 2
  %v390 = vmax.f32 %v388, %v389
  %v391 = vrot.slane %v390, 1
  %v392 = vmax.f32 %v390, %v391
  %v393 = vsub.f32 %v373, %v383
  %v394 = vsub.f32 %v374, %v392
  %v395 = vsub.f32 %v375, %v383
  %v396 = vsub.f32 %v376, %v392
  %v397 = vmul.f32 %v393, 1.442695
  %v398 = vpow.pop %v397
  %v399 = vmul.f32 %v394, 1.442695
  %v400 = vpow.pop %v399
  %v401 = vmul.f32 %v395, 1.442695
  %v402 = vpow.pop %v401
  %v403 = vmul.f32 %v396, 1.442695
  %v404 = vpow.pop %v403
  %v405 = vadd.f32 %v398, %v402
  %v406 = vrot.slane %v405, 4
  %v407 = vadd.f32 %v405, %v406
  %v408 = vrot.slane %v407, 2
  %v409 = vadd.f32 %v407, %v408
  %v410 = vrot.slane %v409, 1
  %v411 = vadd.f32 %v409, %v410
  %v412 = vsel %vm317, %v400, 0.0
  %v413 = vsel %vm317, %v404, 0.0
  %v414 = vadd.f32 %v412, %v413
  %v415 = vrot.slane %v414, 4
  %v416 = vadd.f32 %v414, %v415
  %v417 = vrot.slane %v416, 2
  %v418 = vadd.f32 %v416, %v417
  %v419 = vrot.slane %v418, 1
  %v420 = vadd.f32 %v418, %v419
  %v421 = vrcp.pop %v411
  %v422 = vrcp.pop %v420
  %v423 = vmul.f32 %v398, %v421
  %v424 = vmul.f32 %v400, %v422
  %v425 = vmul.f32 %v402, %v421
  %v426 = vmul.f32 %v404, %v422
  %v427 = vmul.f32 %v423, %v270
  %v428 = vmul.f32 %v424, %v272
  %v429 = vmul.f32 %v425, %v274
  %v430 = vmul.f32 %v426, %v276
  %v431 = vadd.f32 %v365, %v427
  %v432 = vadd.f32 %v366, %v428
  %v433 = vadd.f32 %v367, %v429
  %v434 = vadd.f32 %v368, %v430
  %v435 = vmul.f32 %v200, %v240
  %v436 = vmul.f32 %v202, %v242
  %v437 = vmul.f32 %v204, %v244
  %v438 = vmul.f32 %v206, %v246
  %v439 = vmul.f32 %v435, 0.25
  %v440 = vmul.f32 %v436, 0.25
  %v441 = vmul.f32 %v437, 0.25
  %v442 = vmul.f32 %v438, 0.25
  %v443 = vmax.f32 %v439, %v441
  %v444 = vrot.slane %v443, 4
  %v445 = vmax.f32 %v443, %v444
  %v446 = vrot.slane %v445, 2
  %v447 = vmax.f32 %v445, %v446
  %v448 = vrot.slane %v447, 1
  %v449 = vmax.f32 %v447, %v448
  %v450 = vsel %vm317, %v440, -inf
  %v451 = vsel %vm317, %v442, -inf
  %v452 = vmax.f32 %v450, %v451
  %v453 = vrot.slane %v452, 4
  %v454 = vmax.f32 %v452, %v453
  %v455 = vrot.slane %v454, 2
  %v456 = vmax.f32 %v454, %v455
  %v457 = vrot.slane %v456, 1
  %v458 = vmax.f32 %v456, %v457
  %v459 = vsub.f32 %v439, %v449
  %v460 = vsub.f32 %v440, %v458
  %v461 = vsub.f32 %v441, %v449
  %v462 = vsub.f32 %v442, %v458
  %v463 = vmul.f32 %v459, 1.442695
  %v464 = vpow.pop %v463
  %v465 = vmul.f32 %v460, 1.442695
  %v466 = vpow.pop %v465
  %v467 = vmul.f32 %v461, 1.442695
  %v468 = vpow.pop %v467
  %v469 = vmul.f32 %v462, 1.442695
  %v470 = vpow.pop %v469
  %v471 = vadd.f32 %v464, %v468
  %v472 = vrot.slane %v471, 4
  %v473 = vadd.f32 %v471, %v472
  %v474 = vrot.slane %v473, 2
  %v475 = vadd.f32 %v473, %v474
  %v476 = vrot.slane %v475, 1
  %v477 = vadd.f32 %v475, %v476
  %v478 = vsel %vm317, %v466, 0.0
  %v479 = vsel %vm317, %v470, 0.0
  %v480 = vadd.f32 %v478, %v479
  %v481 = vrot.slane %v480, 4
  %v482 = vadd.f32 %v480, %v481
  %v483 = vrot.slane %v482, 2
  %v484 = vadd.f32 %v482, %v483
  %v485 = vrot.slane %v484, 1
  %v486 = vadd.f32 %v484, %v485
  %v487 = vrcp.pop %v477
  %v488 = vrcp.pop %v486
  %v489 = vmul.f32 %v464, %v487
  %v490 = vmul.f32 %v466, %v488
  %v491 = vmul.f32 %v468, %v487
  %v492 = vmul.f32 %v470, %v488
  %v493 = vmul.f32 %v489, %v280
  %v494 = vmul.f32 %v490, %v282
  %v495 = vmul.f32 %v491, %v284
  %v496 = vmul.f32 %v492, %v286
  %v497 = vadd.f32 %v431, %v493
  %v498 = vadd.f32 %v432, %v494
  %v499 = vadd.f32 %v433, %v495
  %v500 = vadd.f32 %v434, %v496
  %v501 = vmul.f32 %v210, %v250
  %v502 = vmul.f32 %v212, %v252
  %v503 = vmul.f32 %v214, %v254
  %v504 = vmul.f32 %v216, %v256
  %v505 = vmul.f32 %v501, 0.25
  %v506 = vmul.f32 %v502, 0.25
  %v507 = vmul.f32 %v503, 0.25
  %v508 = vmul.f32 %v504, 0.25
  %v509 = vmax.f32 %v505, %v507
  %v510 = vrot.slane %v509, 4
  %v511 = vmax.f32 %v509, %v510
  %v512 = vrot.slane %v511, 2
  %v513 = vmax.f32 %v511, %v512
  %v514 = vrot.slane %v513, 1
  %v515 = vmax.f32 %v513, %v514
  %v516 = vsel %vm317, %v506, -inf
  %v517 = vsel %vm317, %v508, -inf
  %v518 = vmax.f32 %v516, %v517
  %v519 = vrot.slane %v518, 4
  %v520 = vmax.f32 %v518, %v519
  %v521 = vrot.slane %v520, 2
  %v522 = vmax.f32 %v520, %v521
  %v523 = vrot.slane %v522, 1
  %v524 = vmax.f32 %v522, %v523
  %v525 = vsub.f32 %v505, %v515
  %v526 = vsub.f32 %v506, %v524
  %v527 = vsub.f32 %v507, %v515
  %v528 = vsub.f32 %v508, %v524
  %v529 = vmul.f32 %v525, 1.442695
  %v530 = vpow.pop %v529
  %v531 = vmul.f32 %v526, 1.442695
  %v532 = vpow.pop %v531
  %v533 = vmul.f32 %v527, 1.442695
  %v534 = vpow.pop %v533
  %v535 = vmul.f32 %v528, 1.442695
  %v536 = vpow.pop %v535
  %v537 = vadd.f32 %v530, %v534
  %v538 = vrot.slane %v537, 4
  %v539 = vadd.f32 %v537, %v538
  %v540 = vrot.slane %v539, 2
  %v541 = vadd.f32 %v539, %v540
  %v542 = vrot.slane %v541, 1
  %v543 = vadd.f32 %v541, %v542
  %v544 = vsel %vm317, %v532, 0.0
  %v545 = vsel %vm317, %v536, 0.0
  %v546 = vadd.f32 %v544, %v545
  %v547 = vrot.slane %v546, 4
  %v548 = vadd.f32 %v546, %v547
  %v549 = vrot.slane %v548, 2
  %v550 = vadd.f32 %v548, %v549
  %v551 = vrot.slane %v550, 1
  %v552 = vadd.f32 %v550, %v551
  %v553 = vrcp.pop %v543
  %v554 = vrcp.pop %v552
  %v555 = vmul.f32 %v530, %v553
  %v556 = vmul.f32 %v532, %v554
  %v557 = vmul.f32 %v534, %v553
  %v558 = vmul.f32 %v536, %v554
  %v559 = vmul.f32 %v555, %v290
  %v560 = vmul.f32 %v556, %v292
  %v561 = vmul.f32 %v557, %v294
  %v562 = vmul.f32 %v558, %v296
  %v563 = vadd.f32 %v497, %v559
  %v564 = vadd.f32 %v498, %v560
  %v565 = vadd.f32 %v499, %v561
  %v566 = vadd.f32 %v500, %v562
  %v567 = vpack.c.bf16 %v565, %v563
  %v568 = vpack.c.bf16 %v566, %v564
  %v571 = vunpack.c.l.b16 %v567
  %v572 = vunpack.c.l.b16 %v568
  %v573 = vunpack.c.h.b16 %v567
  %v574 = vunpack.c.h.b16 %v568
  %v575 = vpack.c.b16 %v572, %v571
  %v576 = vpack.c.b16 %v574, %v573
  %vm579 = vcmask 1043456
  %vm580 = vcmask 785412
  %vm581 = vmor %vm580, %vm579
  %582 = vst.msk [vmem:[%s2] sm:$0xff] %vm581, %v575
  %583 = vst.msk [vmem:[%s2 + $0x8] sm:$0xff] %vm581, %v576
  // Predicated region
  $region10: #{sub_cost_volum_forward.14} parent=0 // pred_check
    _
  $region11: #{sub_cost_volum_forward.14} parent=0 // pred_check_branch
    %585 = sbr.rel (0) target = $region13
  $region12: #{sub_cost_volum_forward.14} parent=0 // pred_region
    _
  $region13: #{sub_cost_volum_forward.14} parent=0 // pred_fallthru
    _
  // Predicated region
  $region14: #{sub_cost_volum_forward.14} parent=0 // pred_check
    _
  $region15: #{sub_cost_volum_forward.14} parent=0 // pred_check_branch
    %587 = sbr.rel (0) target = $region17
  $region16: #{sub_cost_volum_forward.14} parent=0 // pred_region
    _
  $region17: #{sub_cost_volum_forward.14} parent=0 // pred_fallthru
    _

// kernel: sub_cost_volum_forward.13
$region0: #{sub_cost_volum_forward.13}
  #allocation0 [shape = 'u32[]', space=smem, size = 0x4, offset = 0x4, fixed_abs, tag = 'smem constant byte address 0x4 - core index']
  #allocation1 [shape = 'u32[144,128]{1,0:T(1,128)}', space=vmem, size = 0x12000, scoped, tag = 'internal scratch']
  %s0 = inlined_call_operand.vmem [shape: bf16[1,8,18], index: 0, kind: input, shape index: {}]
  %s1 = inlined_call_operand.vmem [shape: bf16[1,18,64], index: 1, kind: input, shape index: {}]
  %s2 = inlined_call_operand.vmem [shape: f32[1,8,64], index: 2, kind: output, shape index: {}]
  %s3 = sld [smem:[#allocation0]]
  $region18: #{sub_cost_volum_forward.13} parent=0
    _
  %s5 = ssub.s32 1, %s3
  %s6 = scalar_select 0, %s5, %s3
  // Predicated region
  $region2: #{sub_cost_volum_forward.13} parent=0 // pred_check
    _
  $region3: #{sub_cost_volum_forward.13} parent=0 // pred_check_branch
    %8 = sbr.rel (0) target = $region5
  $region4: #{sub_cost_volum_forward.13} parent=0 // pred_region
    _
  $region5: #{sub_cost_volum_forward.13} parent=0 // pred_fallthru
    _
  // Predicated region
  $region6: #{sub_cost_volum_forward.13} parent=0 // pred_check
    _
  $region7: #{sub_cost_volum_forward.13} parent=0 // pred_check_branch
    %10 = sbr.rel (0) target = $region9
  $region8: #{sub_cost_volum_forward.13} parent=0 // pred_region
    _
  $region9: #{sub_cost_volum_forward.13} parent=0 // pred_fallthru
    _
  %v12 = vld [vmem:[%s0] sm:$0xf]
  %v13 = vld [vmem:[%s1] sm:$0xf]
  %v14 = vld [vmem:[%s1 + $0x4] sm:$0xf]
  %v15 = vld [vmem:[%s1 + $0x8] sm:$0x1]
  %v19 = vunpack.c.l.b16 %v13
  %v20 = vunpack.c.l.b16 %v14
  %v21 = vunpack.c.l.b16 %v15
  %v22 = vpack.c.b16 %v20, %v19
  %v23 = vpack.c.b16 %v21, %v21
  %vm25 = vcmask 146432
  %v27 = vsel %vm25, %v12, 0
  %vm29 = vcmask 1040384
  %v31 = vsel %vm29, %v23, 0
  %33 = vmatprep.subr.bf16.mxu0 0
  %34 = vmatpush1.bf16.msra.mxu0 0
  %35 = vmatprep.subr.bf16.mxu0 0
  %36 = vmatpush1.bf16.msra.mxu0 0
  %37 = vmatprep.subr.bf16.mxu0 0
  %38 = vmatpush1.bf16.msra.mxu0 0
  %39 = vmatprep.subr.bf16.mxu0 0
  %40 = vmatpush1.bf16.msra.mxu0 0
  %41 = vmatprep.subr.bf16.mxu0 0
  %42 = vmatpush1.bf16.msra.mxu0 0
  %43 = vmatprep.subr.bf16.mxu0 0
  %44 = vmatpush1.bf16.msra.mxu0 0
  %45 = vmatprep.subr.bf16.mxu0 0
  %46 = vmatpush1.bf16.msra.mxu0 %v31
  %47 = vmatprep.subr.bf16.mxu0 0
  %48 = vmatpush1.bf16.msra.mxu0 %v22
  %49 = vmatprep.subr.bf16.mxu0 0
  %50 = vmatpush2.bf16.msra.mxu0 0
  %51 = vmatprep.subr.bf16.mxu0 0
  %52 = vmatpush2.bf16.msra.mxu0 0
  %53 = vmatprep.subr.bf16.mxu0 0
  %54 = vmatpush2.bf16.msra.mxu0 0
  %55 = vmatprep.subr.bf16.mxu0 0
  %56 = vmatpush2.bf16.msra.mxu0 0
  %57 = vmatprep.subr.bf16.mxu0 0
  %58 = vmatpush2.bf16.msra.mxu0 0
  %59 = vmatprep.subr.bf16.mxu0 0
  %60 = vmatpush2.bf16.msra.mxu0 0
  %61 = vmatprep.subr.bf16.mxu0 0
  %62 = vmatpush2.bf16.msra.mxu0 0
  %63 = vmatprep.subr.bf16.mxu0 0
  %64 = vmatpush2.bf16.msra.mxu0 0
  %65 = vmatprep.mubr.bf16.mxu0 0
  %66 = vmatmul.mubr.bf16.gmra.mxu0 %v27
  %v67 = vpop.f32.mrf.mxu0
  %v68 = vadd.f32 0.0, %v67
  %v69 = vpop.f32.mrf.mxu0
  %v70 = vpop.f32.mrf.mxu0
  %v71 = vpop.f32.mrf.mxu0
  %72 = vdwg.mxu0
  %vm73 = vcmask 523264
  %74 = vst.msk [vmem:[%s2] sm:$0xff] %vm73, %v68
  // Predicated region
  $region10: #{sub_cost_volum_forward.13} parent=0 // pred_check
    _
  $region11: #{sub_cost_volum_forward.13} parent=0 // pred_check_branch
    %76 = sbr.rel (0) target = $region13
  $region12: #{sub_cost_volum_forward.13} parent=0 // pred_region
    _
  $region13: #{sub_cost_volum_forward.13} parent=0 // pred_fallthru
    _
  // Predicated region
  $region14: #{sub_cost_volum_forward.13} parent=0 // pred_check
    _
  $region15: #{sub_cost_volum_forward.13} parent=0 // pred_check_branch
    %78 = sbr.rel (0) target = $region17
  $region16: #{sub_cost_volum_forward.13} parent=0 // pred_region
    _
  $region17: #{sub_cost_volum_forward.13} parent=0 // pred_fallthru
    _

// kernel: sub_cost_volum_forward.12
$region0: #{sub_cost_volum_forward.12}
  #allocation0 [shape = 'u32[]', space=smem, size = 0x4, offset = 0x4, fixed_abs, tag = 'smem constant byte address 0x4 - core index']
  #allocation1 [shape = 'u32[144,128]{1,0:T(1,128)}', space=vmem, size = 0x12000, scoped, tag = 'internal scratch']
  %s0 = inlined_call_operand.vmem [shape: bf16[1,8,50], index: 0, kind: input, shape index: {}]
  %s1 = inlined_call_operand.vmem [shape: bf16[1,50,64], index: 1, kind: input, shape index: {}]
  %s2 = inlined_call_operand.vmem [shape: f32[1,8,64], index: 2, kind: output, shape index: {}]
  %s3 = sld [smem:[#allocation0]]
  $region18: #{sub_cost_volum_forward.12} parent=0
    _
  %s5 = ssub.s32 1, %s3
  %s6 = scalar_select 0, %s5, %s3
  // Predicated region
  $region2: #{sub_cost_volum_forward.12} parent=0 // pred_check
    _
  $region3: #{sub_cost_volum_forward.12} parent=0 // pred_check_branch
    %8 = sbr.rel (0) target = $region5
  $region4: #{sub_cost_volum_forward.12} parent=0 // pred_region
    _
  $region5: #{sub_cost_volum_forward.12} parent=0 // pred_fallthru
    _
  // Predicated region
  $region6: #{sub_cost_volum_forward.12} parent=0 // pred_check
    _
  $region7: #{sub_cost_volum_forward.12} parent=0 // pred_check_branch
    %10 = sbr.rel (0) target = $region9
  $region8: #{sub_cost_volum_forward.12} parent=0 // pred_region
    _
  $region9: #{sub_cost_volum_forward.12} parent=0 // pred_fallthru
    _
  %v12 = vld [vmem:[%s0] sm:$0xf]
  %v13 = vld [vmem:[%s1] sm:$0xf]
  %v14 = vld [vmem:[%s1 + $0x4] sm:$0xf]
  %v15 = vld [vmem:[%s1 + $0x8] sm:$0xf]
  %v16 = vld [vmem:[%s1 + $0xc] sm:$0xf]
  %v17 = vld [vmem:[%s1 + $0x10] sm:$0xf]
  %v18 = vld [vmem:[%s1 + $0x14] sm:$0xf]
  %v19 = vld [vmem:[%s1 + $0x18] sm:$0x1]
  %v27 = vunpack.c.l.b16 %v13
  %v28 = vunpack.c.l.b16 %v14
  %v29 = vunpack.c.l.b16 %v15
  %v30 = vunpack.c.l.b16 %v16
  %v31 = vunpack.c.l.b16 %v17
  %v32 = vunpack.c.l.b16 %v18
  %v33 = vunpack.c.l.b16 %v19
  %v34 = vpack.c.b16 %v28, %v27
  %v35 = vpack.c.b16 %v30, %v29
  %v36 = vpack.c.b16 %v32, %v31
  %v37 = vpack.c.b16 %v33, %v33
  %vm41 = vcmask 408576
  %v43 = vsel %vm41, %v12, 0
  %vm45 = vcmask 1040384
  %v47 = vsel %vm45, %v37, 0
  %49 = vmatprep.subr.bf16.mxu0 0
  %50 = vmatpush1.bf16.msra.mxu0 0
  %51 = vmatprep.subr.bf16.mxu0 0
  %52 = vmatpush1.bf16.msra.mxu0 0
  %53 = vmatprep.subr.bf16.mxu0 0
  %54 = vmatpush1.bf16.msra.mxu0 0
  %55 = vmatprep.subr.bf16.mxu0 0
  %56 = vmatpush1.bf16.msra.mxu0 0
  %57 = vmatprep.subr.bf16.mxu0 0
  %58 = vmatpush1.bf16.msra.mxu0 %v47
  %59 = vmatprep.subr.bf16.mxu0 0
  %60 = vmatpush1.bf16.msra.mxu0 %v36
  %61 = vmatprep.subr.bf16.mxu0 0
  %62 = vmatpush1.bf16.msra.mxu0 %v35
  %63 = vmatprep.subr.bf16.mxu0 0
  %64 = vmatpush1.bf16.msra.mxu0 %v34
  %65 = vmatprep.subr.bf16.mxu0 0
  %66 = vmatpush2.bf16.msra.mxu0 0
  %67 = vmatprep.subr.bf16.mxu0 0
  %68 = vmatpush2.bf16.msra.mxu0 0
  %69 = vmatprep.subr.bf16.mxu0 0
  %70 = vmatpush2.bf16.msra.mxu0 0
  %71 = vmatprep.subr.bf16.mxu0 0
  %72 = vmatpush2.bf16.msra.mxu0 0
  %73 = vmatprep.subr.bf16.mxu0 0
  %74 = vmatpush2.bf16.msra.mxu0 0
  %75 = vmatprep.subr.bf16.mxu0 0
  %76 = vmatpush2.bf16.msra.mxu0 0
  %77 = vmatprep.subr.bf16.mxu0 0
  %78 = vmatpush2.bf16.msra.mxu0 0
  %79 = vmatprep.subr.bf16.mxu0 0
  %80 = vmatpush2.bf16.msra.mxu0 0
  %81 = vmatprep.mubr.bf16.mxu0 0
  %82 = vmatmul.mubr.bf16.gmra.mxu0 %v43
  %v83 = vpop.f32.mrf.mxu0
  %v84 = vadd.f32 0.0, %v83
  %v85 = vpop.f32.mrf.mxu0
  %v86 = vpop.f32.mrf.mxu0
  %v87 = vpop.f32.mrf.mxu0
  %88 = vdwg.mxu0
  %vm89 = vcmask 523264
  %90 = vst.msk [vmem:[%s2] sm:$0xff] %vm89, %v84
  // Predicated region
  $region10: #{sub_cost_volum_forward.12} parent=0 // pred_check
    _
  $region11: #{sub_cost_volum_forward.12} parent=0 // pred_check_branch
    %92 = sbr.rel (0) target = $region13
  $region12: #{sub_cost_volum_forward.12} parent=0 // pred_region
    _
  $region13: #{sub_cost_volum_forward.12} parent=0 // pred_fallthru
    _
  // Predicated region
  $region14: #{sub_cost_volum_forward.12} parent=0 // pred_check
    _
  $region15: #{sub_cost_volum_forward.12} parent=0 // pred_check_branch
    %94 = sbr.rel (0) target = $region17
  $region16: #{sub_cost_volum_forward.12} parent=0 // pred_region
    _
  $region17: #{sub_cost_volum_forward.12} parent=0 // pred_fallthru
    _

// kernel: sub_cost_volum_forward.11
$region0: #{sub_cost_volum_forward.11}
  #allocation0 [shape = 'u32[]', space=smem, size = 0x4, offset = 0x4, fixed_abs, tag = 'smem constant byte address 0x4 - core index']
  #allocation1 [shape = 'u32[144,128]{1,0:T(1,128)}', space=vmem, size = 0x12000, scoped, tag = 'internal scratch']
  %s0 = inlined_call_operand.vmem [shape: bf16[1,8,162], index: 0, kind: input, shape index: {}]
  %s1 = inlined_call_operand.vmem [shape: bf16[1,162,96], index: 1, kind: input, shape index: {}]
  %s2 = inlined_call_operand.vmem [shape: f32[1,8,96], index: 2, kind: output, shape index: {}]
  %s3 = sld [smem:[#allocation0]]
  $region18: #{sub_cost_volum_forward.11} parent=0
    _
  %s5 = ssub.s32 1, %s3
  %s6 = scalar_select 0, %s5, %s3
  // Predicated region
  $region2: #{sub_cost_volum_forward.11} parent=0 // pred_check
    _
  $region3: #{sub_cost_volum_forward.11} parent=0 // pred_check_branch
    %8 = sbr.rel (0) target = $region5
  $region4: #{sub_cost_volum_forward.11} parent=0 // pred_region
    _
  $region5: #{sub_cost_volum_forward.11} parent=0 // pred_fallthru
    _
  // Predicated region
  $region6: #{sub_cost_volum_forward.11} parent=0 // pred_check
    _
  $region7: #{sub_cost_volum_forward.11} parent=0 // pred_check_branch
    %10 = sbr.rel (0) target = $region9
  $region8: #{sub_cost_volum_forward.11} parent=0 // pred_region
    _
  $region9: #{sub_cost_volum_forward.11} parent=0 // pred_fallthru
    _
  %v12 = vld [vmem:[%s0] sm:$0xff]
  %v13 = vld [vmem:[%s1] sm:$0xf]
  %v14 = vld [vmem:[%s1 + $0x4] sm:$0xf]
  %v15 = vld [vmem:[%s1 + $0x8] sm:$0xf]
  %v16 = vld [vmem:[%s1 + $0xc] sm:$0xf]
  %v17 = vld [vmem:[%s1 + $0x10] sm:$0xf]
  %v18 = vld [vmem:[%s1 + $0x14] sm:$0xf]
  %v19 = vld [vmem:[%s1 + $0x18] sm:$0xf]
  %v20 = vld [vmem:[%s1 + $0x1c] sm:$0xf]
  %v21 = vld [vmem:[%s1 + $0x20] sm:$0xf]
  %v22 = vld [vmem:[%s1 + $0x24] sm:$0xf]
  %v23 = vld [vmem:[%s1 + $0x28] sm:$0xf]
  %v24 = vld [vmem:[%s1 + $0x2c] sm:$0xf]
  %v25 = vld [vmem:[%s1 + $0x30] sm:$0xf]
  %v26 = vld [vmem:[%s1 + $0x34] sm:$0xf]
  %v27 = vld [vmem:[%s1 + $0x38] sm:$0xf]
  %v28 = vld [vmem:[%s1 + $0x3c] sm:$0xf]
  %v29 = vld [vmem:[%s1 + $0x40] sm:$0xf]
  %v30 = vld [vmem:[%s1 + $0x44] sm:$0xf]
  %v31 = vld [vmem:[%s1 + $0x48] sm:$0xf]
  %v32 = vld [vmem:[%s1 + $0x4c] sm:$0xf]
  %v33 = vld [vmem:[%s1 + $0x50] sm:$0x1]
  %v35 = vunpack.c.l.b16 %v12
  %v36 = vunpack.c.h.b16 %v12
  %v37 = vpack.c.b16 %v35, %v35
  %v38 = vpack.c.b16 %v36, %v36
  %v61 = vunpack.c.l.b16 %v13
  %v62 = vunpack.c.l.b16 %v14
  %v63 = vunpack.c.l.b16 %v15
  %v64 = vunpack.c.l.b16 %v16
  %v65 = vunpack.c.l.b16 %v17
  %v66 = vunpack.c.l.b16 %v18
  %v67 = vunpack.c.l.b16 %v19
  %v68 = vunpack.c.l.b16 %v20
  %v69 = vunpack.c.l.b16 %v21
  %v70 = vunpack.c.l.b16 %v22
  %v71 = vunpack.c.l.b16 %v23
  %v72 = vunpack.c.l.b16 %v24
  %v73 = vunpack.c.l.b16 %v25
  %v74 = vunpack.c.l.b16 %v26
  %v75 = vunpack.c.l.b16 %v27
  %v76 = vunpack.c.l.b16 %v28
  %v77 = vunpack.c.l.b16 %v29
  %v78 = vunpack.c.l.b16 %v30
  %v79 = vunpack.c.l.b16 %v31
  %v80 = vunpack.c.l.b16 %v32
  %v81 = vunpack.c.l.b16 %v33
  %v82 = vpack.c.b16 %v62, %v61
  %v83 = vpack.c.b16 %v64, %v63
  %v84 = vpack.c.b16 %v66, %v65
  %v85 = vpack.c.b16 %v68, %v67
  %v86 = vpack.c.b16 %v70, %v69
  %v87 = vpack.c.b16 %v72, %v71
  %v88 = vpack.c.b16 %v74, %v73
  %v89 = vpack.c.b16 %v76, %v75
  %v90 = vpack.c.b16 %v78, %v77
  %v91 = vpack.c.b16 %v80, %v79
  %v92 = vpack.c.b16 %v81, %v81
  %vm103 = vcmask 277504
  %v105 = vsel %vm103, %v38, 0
  %vm107 = vcmask 1040384
  %v109 = vsel %vm107, %v92, 0
  %111 = vmatprep.subr.bf16.mxu0 0
  %112 = vmatpush1.bf16.msra.mxu0 %v89
  %113 = vmatprep.subr.bf16.mxu0 0
  %114 = vmatpush1.bf16.msra.mxu0 %v88
  %115 = vmatprep.subr.bf16.mxu0 0
  %116 = vmatpush1.bf16.msra.mxu0 %v87
  %117 = vmatprep.subr.bf16.mxu0 0
  %118 = vmatpush1.bf16.msra.mxu0 %v86
  %119 = vmatprep.subr.bf16.mxu0 0
  %120 = vmatpush1.bf16.msra.mxu0 %v85
  %121 = vmatprep.subr.bf16.mxu0 0
  %122 = vmatpush1.bf16.msra.mxu0 %v84
  %123 = vmatprep.subr.bf16.mxu0 0
  %124 = vmatpush1.bf16.msra.mxu0 %v83
  %125 = vmatprep.subr.bf16.mxu0 0
  %126 = vmatpush1.bf16.msra.mxu0 %v82
  %127 = vmatprep.subr.bf16.mxu0 0
  %128 = vmatpush2.bf16.msra.mxu0 0
  %129 = vmatprep.subr.bf16.mxu0 0
  %130 = vmatpush2.bf16.msra.mxu0 0
  %131 = vmatprep.subr.bf16.mxu0 0
  %132 = vmatpush2.bf16.msra.mxu0 0
  %133 = vmatprep.subr.bf16.mxu0 0
  %134 = vmatpush2.bf16.msra.mxu0 0
  %135 = vmatprep.subr.bf16.mxu0 0
  %136 = vmatpush2.bf16.msra.mxu0 0
  %137 = vmatprep.subr.bf16.mxu0 0
  %138 = vmatpush2.bf16.msra.mxu0 %v109
  %139 = vmatprep.subr.bf16.mxu0 0
  %140 = vmatpush2.bf16.msra.mxu0 %v91
  %141 = vmatprep.subr.bf16.mxu0 0
  %142 = vmatpush2.bf16.msra.mxu0 %v90
  %143 = vmatprep.mubr.bf16.mxu0 %v105
  %144 = vmatmul.mubr.bf16.gmra.mxu0 %v37
  %v145 = vpop.f32.mrf.mxu0
  %v146 = vadd.f32 0.0, %v145
  %v147 = vpop.f32.mrf.mxu0
  %v148 = vpop.f32.mrf.mxu0
  %v149 = vpop.f32.mrf.mxu0
  %150 = vdwg.mxu0
  %vm151 = vcmask 785408
  %152 = vst.msk [vmem:[%s2] sm:$0xff] %vm151, %v146
  // Predicated region
  $region10: #{sub_cost_volum_forward.11} parent=0 // pred_check
    _
  $region11: #{sub_cost_volum_forward.11} parent=0 // pred_check_branch
    %154 = sbr.rel (0) target = $region13
  $region12: #{sub_cost_volum_forward.11} parent=0 // pred_region
    _
  $region13: #{sub_cost_volum_forward.11} parent=0 // pred_fallthru
    _
  // Predicated region
  $region14: #{sub_cost_volum_forward.11} parent=0 // pred_check
    _
  $region15: #{sub_cost_volum_forward.11} parent=0 // pred_check_branch
    %156 = sbr.rel (0) target = $region17
  $region16: #{sub_cost_volum_forward.11} parent=0 // pred_region
    _
  $region17: #{sub_cost_volum_forward.11} parent=0 // pred_fallthru
    _

</llo_original>
